<compile_context>
chip_gen: v7x
topology: tpu7x:2x2x1
jax: 0.10.0
libtpu: 0.0.40
codegen_flags: <defaults>
</compile_context>

<pallas_src>
import functools

import jax
import jax.numpy as jnp
from jax.experimental import pallas as pl
from jax.experimental.pallas import tpu as pltpu

# ----------------------- model hyper-parameters (small, synthetic) ------------------
NJOINTS = 8                          # opt['model']['DFNet']['num_parts']
BONE_DIM = 4                         # quaternion per joint
FEAT = 8                             # StructureEncoder local feature size
HID = BONE_DIM + FEAT                # BoneMLP hidden width (12)
LATENT = NJOINTS * FEAT              # encoder output width (64)
QDIM = NJOINTS * BONE_DIM            # flattened quaternion width (32)
HIDALL = NJOINTS * HID               # all joints' hidden lanes (96)
DF_HIDDEN = 128                      # DFNet hidden width (128 fills a full MXU pass)
PARENTS = (-1, 0, 0, 1, 1, 2, 3, 4)  # kinematic tree, root has -1


def _compute_levels(parents):
    depth = []
    for j, p in enumerate(parents):
        depth.append(0 if p < 0 else depth[p] + 1)
    return tuple(tuple(j for j, dj in enumerate(depth) if dj == d)
                 for d in range(max(depth) + 1))


LEVELS = _compute_levels(PARENTS)    # ((0,), (1, 2), (3, 4, 5), (6, 7))
NLEVELS = len(LEVELS)


def _round_up(x, m):
    return ((x + m - 1) // m) * m


# -------------------------------- fused forward kernel --------------------------------
def _nrdf_kernel(quat_ref,                                   # (TB, 32)
                 wq_ref, b1_ref, wpf_ref, w2_ref, b2_ref,    # packed encoder weights
                 dw0_ref, db0_ref, dw1_ref, db1_ref,
                 dw2_ref, db2_ref, dw3_ref, db3_ref,         # DFNet weights
                 dist_ref):                                  # (TB, 1)
    f32 = jnp.float32

    # Hoisted quaternion contribution for ALL joints: one block-diagonal matmul.
    # qc[:, j*HID:(j+1)*HID] = q_j @ w1_q[j] + b1[j]
    qc = jnp.dot(quat_ref[...], wq_ref[...], preferred_element_type=f32) + b1_ref[...]

    # Level 0: root joints have no parent feature -> h = ReLU(qc).
    h = jnp.maximum(qc, 0.0)
    feat = jnp.maximum(
        jnp.dot(h, w2_ref[0], preferred_element_type=f32) + b2_ref[0], 0.0)

    # Remaining levels: parent-feature matmul + BoneMLP second layer, all block-diagonal.
    # Non-level lanes of the per-level weights are zero, so `feat + f` scatters the new
    # joint features into their lanes without any lane re-layout.
    for l in range(1, NLEVELS):  # static unroll (3 iterations)
        h = jnp.maximum(
            qc + jnp.dot(feat, wpf_ref[l], preferred_element_type=f32), 0.0)
        f = jnp.maximum(
            jnp.dot(h, w2_ref[l], preferred_element_type=f32) + b2_ref[l], 0.0)
        feat = feat + f

    # DFNet MLP: LATENT -> H -> H -> H -> 1
    # TODO(synk): on v6e/v7x, casting weights/activations to bf16 for these dots would
    # halve DMA/VMEM traffic; kept f32 here for bit-accurate parity with the reference.
    z = jnp.maximum(jnp.dot(feat, dw0_ref[...], preferred_element_type=f32) + db0_ref[...], 0.0)
    z = jnp.maximum(jnp.dot(z, dw1_ref[...], preferred_element_type=f32) + db1_ref[...], 0.0)
    z = jnp.maximum(jnp.dot(z, dw2_ref[...], preferred_element_type=f32) + db2_ref[...], 0.0)
    dist_ref[...] = jnp.dot(z, dw3_ref[...], preferred_element_type=f32) + db3_ref[...]


def _weight_spec(a):
    n = a.ndim
    # Full-array block, constant index map -> stays resident in VMEM across grid steps.
    return pl.BlockSpec(a.shape, lambda b, n=n: (0,) * n)


def _run_fused(packed, quat_flat, tb):
    bp = quat_flat.shape[0]
    wq, b1a, wpf, w2s, b2s = packed["enc"]
    dfp = packed["dfnet"]
    weights = (wq, b1a, wpf, w2s, b2s) + tuple(dfp)
    return pl.pallas_call(
        _nrdf_kernel,
        out_shape=jax.ShapeDtypeStruct((bp, 1), jnp.float32),
        grid=(bp // tb,),
        in_specs=[pl.BlockSpec((tb, QDIM), lambda b: (b, 0))]
                 + [_weight_spec(w) for w in weights],
        out_specs=pl.BlockSpec((tb, 1), lambda b: (b, 0)),
        compiler_params=pltpu.CompilerParams(dimension_semantics=("parallel",)),
    )(quat_flat, *weights)


def nrdf_apply(packed, quat_flat, tb_max=512):
    """Fused encoder + DFNet. quat_flat: (B, NJOINTS*4) -> dist (B, 1)."""
    b = quat_flat.shape[0]
    tb = min(tb_max, _round_up(b, 8))
    bp = _round_up(b, tb)
    if bp != b:
        quat_flat = jnp.pad(quat_flat, ((0, bp - b), (0, 0)))
    dist = _run_fused(packed, quat_flat, tb)
    return dist[:b]


# ------------------------------------ NRDF forward ------------------------------------
def nrdf_forward(packed, pose_in, dist_gt=None, man_poses=None, train=True,
                 eikonal=0.0, loss_type="l1"):
    b = pose_in.shape[0]
    quat = pose_in.reshape(b, QDIM)

    if not train:
        return {"dist_pred": nrdf_apply(packed, quat)}

    bm = man_poses.shape[0]
    man = man_poses.reshape(bm, QDIM)
    # Co-batch: one fused kernel launch for both pose_in and man_poses.
    dist = nrdf_apply(packed, jnp.concatenate([quat, man], axis=0))
    dist_pred, dist_man = dist[:b], dist[b:]

    diff = dist_pred[:, 0] - dist_gt.reshape(-1)
    loss = jnp.mean(jnp.abs(diff)) if loss_type == "l1" else jnp.mean(diff * diff)
    loss_man = jnp.mean(jnp.abs(dist_man))
    # TODO(synk): eikonal > 0 branch requires autograd of dist_pred w.r.t. pose_in
    # through the Pallas kernel (needs custom_vjp); not implemented here.
    return loss, {"dist": loss, "man_loss": loss_man}


# jit'd entry points: single host dispatch, all glue ops fused around the kernel.
nrdf_forward_train = jax.jit(
    functools.partial(nrdf_forward, train=True, eikonal=0.0, loss_type="l1"))
nrdf_forward_eval = jax.jit(functools.partial(nrdf_forward, train=False))


# --------------------- parameter packing (block-diagonal, per-level) ------------------
def pack_params(params):
    """Build the block-diagonal / per-level packed matrices the kernel consumes."""
    w1, b1, w2, b2 = params["enc"]   # (NJ,HID,HID), (NJ,1,HID), (NJ,HID,FEAT), (NJ,1,FEAT)
    f32 = jnp.float32

    wq = jnp.zeros((QDIM, HIDALL), f32)
    b1a = jnp.zeros((1, HIDALL), f32)
    for j in range(NJOINTS):
        wq = wq.at[j * BONE_DIM:(j + 1) * BONE_DIM, j * HID:(j + 1) * HID].set(
            w1[j, :BONE_DIM, :])
        b1a = b1a.at[0, j * HID:(j + 1) * HID].set(b1[j, 0, :])

    wpf = jnp.zeros((NLEVELS, LATENT, HIDALL), f32)
    w2s = jnp.zeros((NLEVELS, HIDALL, LATENT), f32)
    b2s = jnp.zeros((NLEVELS, 1, LATENT), f32)
    for l, joints in enumerate(LEVELS):
        for j in joints:
            p = PARENTS[j]
            if p >= 0:
                wpf = wpf.at[l, p * FEAT:(p + 1) * FEAT, j * HID:(j + 1) * HID].set(
                    w1[j, BONE_DIM:, :])
            w2s = w2s.at[l, j * HID:(j + 1) * HID, j * FEAT:(j + 1) * FEAT].set(w2[j])
            b2s = b2s.at[l, 0, j * FEAT:(j + 1) * FEAT].set(b2[j, 0, :])

    return {"enc": (wq, b1a, wpf, w2s, b2s), "dfnet": tuple(params["dfnet"])}


# -------------------------------- deterministic params --------------------------------
def init_params(key):
    ks = jax.random.split(key, 12)

    def lin(k, fan_in, shape):
        return (jax.random.normal(k, shape, jnp.float32) / jnp.sqrt(fan_in)).astype(jnp.float32)

    # StructureEncoder: per-joint BoneMLP weights packed along a leading joint axis.
    w1 = lin(ks[0], HID, (NJOINTS, HID, HID))
    w1 = w1.at[0, BONE_DIM:, :].set(0.0)          # root BoneMLP: no parent feature input
    b1 = 0.1 * lin(ks[1], HID, (NJOINTS, 1, HID))
    w2 = lin(ks[2], HID, (NJOINTS, HID, FEAT))
    b2 = 0.1 * lin(ks[3], HID, (NJOINTS, 1, FEAT))
    enc = (w1, b1, w2, b2)

    # DFNet MLP: LATENT -> H -> H -> H -> 1
    dw0 = lin(ks[4], LATENT, (LATENT, DF_HIDDEN));       db0 = 0.1 * lin(ks[5], LATENT, (1, DF_HIDDEN))
    dw1 = lin(ks[6], DF_HIDDEN, (DF_HIDDEN, DF_HIDDEN)); db1 = 0.1 * lin(ks[7], DF_HIDDEN, (1, DF_HIDDEN))
    dw2 = lin(ks[8], DF_HIDDEN, (DF_HIDDEN, DF_HIDDEN)); db2 = 0.1 * lin(ks[9], DF_HIDDEN, (1, DF_HIDDEN))
    dw3 = lin(ks[10], DF_HIDDEN, (DF_HIDDEN, 1));        db3 = 0.1 * lin(ks[11], DF_HIDDEN, (1, 1))
    df = (dw0, db0, dw1, db1, dw2, db2, dw3, db3)
    return {"enc": enc, "dfnet": df}


# -------------------------------- pure-JAX reference -----------------------------------
def _ref_forward(params, pose_in, dist_gt, man_poses, loss_type="l1"):
    w1, b1, w2, b2 = params["enc"]

    def enc(quat):
        b = quat.shape[0]
        feats = [None] * NJOINTS
        for j in range(NJOINTS):
            q = quat[:, j, :]
            pf = feats[PARENTS[j]] if PARENTS[j] >= 0 else jnp.zeros((b, FEAT), jnp.float32)
            x = jnp.concatenate([q, pf], axis=-1)
            h = jnp.maximum(x @ w1[j] + b1[j], 0.0)
            feats[j] = jnp.maximum(h @ w2[j] + b2[j], 0.0)
        return jnp.concatenate(feats, axis=-1)

    dw0, db0, dw1_, db1_, dw2_, db2_, dw3, db3 = params["dfnet"]

    def df(z):
        h = jnp.maximum(z @ dw0 + db0, 0.0)
        h = jnp.maximum(h @ dw1_ + db1_, 0.0)
        h = jnp.maximum(h @ dw2_ + db2_, 0.0)
        return h @ dw3 + db3

    dist_pred = df(enc(pose_in))
    dist_man = df(enc(man_poses))
    diff = dist_pred[:, 0] - dist_gt.reshape(-1)
    loss = jnp.mean(jnp.abs(diff)) if loss_type == "l1" else jnp.mean(diff * diff)
    return loss, jnp.mean(jnp.abs(dist_man)), dist_pred


if __name__ == "__main__":
    key = jax.random.PRNGKey(0)
    kp, kg, km, kw = jax.random.split(key, 4)

    B = 8
    pose_in = jax.random.normal(kp, (B, NJOINTS, BONE_DIM), jnp.float32)
    pose_in = pose_in / jnp.linalg.norm(pose_in, axis=-1, keepdims=True)   # unit quaternions
    dist_gt = jnp.abs(jax.random.normal(kg, (B,), jnp.float32))
    man_poses = jax.random.normal(km, (B, NJOINTS, BONE_DIM), jnp.float32)
    man_poses = man_poses / jnp.linalg.norm(man_poses, axis=-1, keepdims=True)

    params = init_params(kw)
    packed = pack_params(params)

    # training-mode forward (loss, loss dict) — single fused kernel over the co-batch
    loss, loss_dict = nrdf_forward_train(packed, pose_in, dist_gt, man_poses)
    jax.block_until_ready(loss)
    jax.block_until_ready(loss_dict["man_loss"])

    # eval-mode forward
    eval_out = nrdf_forward_eval(packed, pose_in)
    jax.block_until_ready(eval_out["dist_pred"])

    # sanity check against a pure-JAX reference
    ref_loss, ref_man, ref_pred = _ref_forward(params, pose_in, dist_gt, man_poses)
    assert jnp.allclose(loss, ref_loss, atol=1e-3, rtol=1e-3)
    assert jnp.allclose(loss_dict["man_loss"], ref_man, atol=1e-3, rtol=1e-3)
    assert jnp.allclose(eval_out["dist_pred"], ref_pred, atol=1e-3, rtol=1e-3)

    print("KERNEL_OK")
</pallas_src>

<mosaic_0001>
module attributes {stable_mosaic.version = 11 : i64} {
  func.func @_nrdf_kernel(%arg0: i32, %arg1: memref<16x32xf32, #tpu.memory_space<vmem>>, %arg2: memref<32x96xf32, #tpu.memory_space<vmem>>, %arg3: memref<1x96xf32, #tpu.memory_space<vmem>>, %arg4: memref<4x64x96xf32, #tpu.memory_space<vmem>>, %arg5: memref<4x96x64xf32, #tpu.memory_space<vmem>>, %arg6: memref<4x1x64xf32, #tpu.memory_space<vmem>>, %arg7: memref<64x128xf32, #tpu.memory_space<vmem>>, %arg8: memref<1x128xf32, #tpu.memory_space<vmem>>, %arg9: memref<128x128xf32, #tpu.memory_space<vmem>>, %arg10: memref<1x128xf32, #tpu.memory_space<vmem>>, %arg11: memref<128x128xf32, #tpu.memory_space<vmem>>, %arg12: memref<1x128xf32, #tpu.memory_space<vmem>>, %arg13: memref<128x1xf32, #tpu.memory_space<vmem>>, %arg14: memref<1x1xf32, #tpu.memory_space<vmem>>, %arg15: memref<16x1xf32, #tpu.memory_space<vmem>>) attributes {dimension_semantics = [#tpu.dimension_semantics<parallel>], iteration_bounds = array<i64: 1>, scalar_prefetch = 0 : i64, scratch_operands = 0 : i64, tpu.core_type = #tpu.core_type<tc>, window_params = [{transform_indices = @transform_0, window_bounds = array<i64: 16, 32>}, {pipeline_mode = #tpu.pipeline_mode<synchronous>, transform_indices = @transform_1, window_bounds = array<i64: 32, 96>}, {pipeline_mode = #tpu.pipeline_mode<synchronous>, transform_indices = @transform_2, window_bounds = array<i64: 1, 96>}, {pipeline_mode = #tpu.pipeline_mode<synchronous>, transform_indices = @transform_3, window_bounds = array<i64: 4, 64, 96>}, {pipeline_mode = #tpu.pipeline_mode<synchronous>, transform_indices = @transform_4, window_bounds = array<i64: 4, 96, 64>}, {pipeline_mode = #tpu.pipeline_mode<synchronous>, transform_indices = @transform_5, window_bounds = array<i64: 4, 1, 64>}, {pipeline_mode = #tpu.pipeline_mode<synchronous>, transform_indices = @transform_6, window_bounds = array<i64: 64, 128>}, {pipeline_mode = #tpu.pipeline_mode<synchronous>, transform_indices = @transform_7, window_bounds = array<i64: 1, 128>}, {pipeline_mode = #tpu.pipeline_mode<synchronous>, transform_indices = @transform_8, window_bounds = array<i64: 128, 128>}, {pipeline_mode = #tpu.pipeline_mode<synchronous>, transform_indices = @transform_9, window_bounds = array<i64: 1, 128>}, {pipeline_mode = #tpu.pipeline_mode<synchronous>, transform_indices = @transform_10, window_bounds = array<i64: 128, 128>}, {pipeline_mode = #tpu.pipeline_mode<synchronous>, transform_indices = @transform_11, window_bounds = array<i64: 1, 128>}, {pipeline_mode = #tpu.pipeline_mode<synchronous>, transform_indices = @transform_12, window_bounds = array<i64: 128, 1>}, {pipeline_mode = #tpu.pipeline_mode<synchronous>, transform_indices = @transform_13, window_bounds = array<i64: 1, 1>}, {transform_indices = @transform_14, window_bounds = array<i64: 16, 1>}]} {
    %c0 = arith.constant 0 : index
    %c0_0 = arith.constant 0 : index
    %0 = vector.load %arg1[%c0, %c0_0] : memref<16x32xf32, #tpu.memory_space<vmem>>, vector<16x32xf32>
    %c0_1 = arith.constant 0 : index
    %c0_2 = arith.constant 0 : index
    %1 = vector.load %arg2[%c0_1, %c0_2] : memref<32x96xf32, #tpu.memory_space<vmem>>, vector<32x96xf32>
    %cst = arith.constant dense<0.000000e+00> : vector<16x96xf32>
    %2 = tpu.matmul %0, %1, %cst {dimension_numbers = #tpu.dot_dimension_numbers<[1], [0], [0], [1], [0, 0, 1, 1], [], []>} : vector<16x32xf32>, vector<32x96xf32>, vector<16x96xf32> -> vector<16x96xf32>
    %c0_3 = arith.constant 0 : index
    %c0_4 = arith.constant 0 : index
    %3 = vector.load %arg3[%c0_3, %c0_4] : memref<1x96xf32, #tpu.memory_space<vmem>>, vector<1x96xf32>
    %4 = vector.broadcast %3 : vector<1x96xf32> to vector<16x96xf32>
    %5 = arith.addf %2, %4 : vector<16x96xf32>
    %cst_5 = arith.constant 0.000000e+00 : f32
    %6 = vector.broadcast %cst_5 : f32 to vector<16x96xf32>
    %7 = arith.maximumf %5, %6 : vector<16x96xf32>
    %c0_6 = arith.constant 0 : index
    %c0_7 = arith.constant 0 : index
    %c0_8 = arith.constant 0 : index
    %8 = vector.load %arg5[%c0_6, %c0_7, %c0_8] : memref<4x96x64xf32, #tpu.memory_space<vmem>>, vector<1x96x64xf32>
    %9 = vector.shape_cast %8 : vector<1x96x64xf32> to vector<96x64xf32>
    %cst_9 = arith.constant dense<0.000000e+00> : vector<16x64xf32>
    %10 = tpu.matmul %7, %9, %cst_9 {dimension_numbers = #tpu.dot_dimension_numbers<[1], [0], [0], [1], [0, 0, 1, 1], [], []>} : vector<16x96xf32>, vector<96x64xf32>, vector<16x64xf32> -> vector<16x64xf32>
    %c0_10 = arith.constant 0 : index
    %c0_11 = arith.constant 0 : index
    %c0_12 = arith.constant 0 : index
    %11 = vector.load %arg6[%c0_10, %c0_11, %c0_12] : memref<4x1x64xf32, #tpu.memory_space<vmem>>, vector<1x1x64xf32>
    %12 = vector.shape_cast %11 : vector<1x1x64xf32> to vector<1x64xf32>
    %13 = vector.broadcast %12 : vector<1x64xf32> to vector<16x64xf32>
    %14 = arith.addf %10, %13 : vector<16x64xf32>
    %cst_13 = arith.constant 0.000000e+00 : f32
    %15 = vector.broadcast %cst_13 : f32 to vector<16x64xf32>
    %16 = arith.maximumf %14, %15 : vector<16x64xf32>
    %c1 = arith.constant 1 : index
    %c0_14 = arith.constant 0 : index
    %c0_15 = arith.constant 0 : index
    %17 = vector.load %arg4[%c1, %c0_14, %c0_15] : memref<4x64x96xf32, #tpu.memory_space<vmem>>, vector<1x64x96xf32>
    %18 = vector.shape_cast %17 : vector<1x64x96xf32> to vector<64x96xf32>
    %cst_16 = arith.constant dense<0.000000e+00> : vector<16x96xf32>
    %19 = tpu.matmul %16, %18, %cst_16 {dimension_numbers = #tpu.dot_dimension_numbers<[1], [0], [0], [1], [0, 0, 1, 1], [], []>} : vector<16x64xf32>, vector<64x96xf32>, vector<16x96xf32> -> vector<16x96xf32>
    %20 = arith.addf %5, %19 : vector<16x96xf32>
    %cst_17 = arith.constant 0.000000e+00 : f32
    %21 = vector.broadcast %cst_17 : f32 to vector<16x96xf32>
    %22 = arith.maximumf %20, %21 : vector<16x96xf32>
    %c1_18 = arith.constant 1 : index
    %c0_19 = arith.constant 0 : index
    %c0_20 = arith.constant 0 : index
    %23 = vector.load %arg5[%c1_18, %c0_19, %c0_20] : memref<4x96x64xf32, #tpu.memory_space<vmem>>, vector<1x96x64xf32>
    %24 = vector.shape_cast %23 : vector<1x96x64xf32> to vector<96x64xf32>
    %cst_21 = arith.constant dense<0.000000e+00> : vector<16x64xf32>
    %25 = tpu.matmul %22, %24, %cst_21 {dimension_numbers = #tpu.dot_dimension_numbers<[1], [0], [0], [1], [0, 0, 1, 1], [], []>} : vector<16x96xf32>, vector<96x64xf32>, vector<16x64xf32> -> vector<16x64xf32>
    %c1_22 = arith.constant 1 : index
    %c0_23 = arith.constant 0 : index
    %c0_24 = arith.constant 0 : index
    %26 = vector.load %arg6[%c1_22, %c0_23, %c0_24] : memref<4x1x64xf32, #tpu.memory_space<vmem>>, vector<1x1x64xf32>
    %27 = vector.shape_cast %26 : vector<1x1x64xf32> to vector<1x64xf32>
    %28 = vector.broadcast %27 : vector<1x64xf32> to vector<16x64xf32>
    %29 = arith.addf %25, %28 : vector<16x64xf32>
    %cst_25 = arith.constant 0.000000e+00 : f32
    %30 = vector.broadcast %cst_25 : f32 to vector<16x64xf32>
    %31 = arith.maximumf %29, %30 : vector<16x64xf32>
    %32 = arith.addf %16, %31 : vector<16x64xf32>
    %c2 = arith.constant 2 : index
    %c0_26 = arith.constant 0 : index
    %c0_27 = arith.constant 0 : index
    %33 = vector.load %arg4[%c2, %c0_26, %c0_27] : memref<4x64x96xf32, #tpu.memory_space<vmem>>, vector<1x64x96xf32>
    %34 = vector.shape_cast %33 : vector<1x64x96xf32> to vector<64x96xf32>
    %cst_28 = arith.constant dense<0.000000e+00> : vector<16x96xf32>
    %35 = tpu.matmul %32, %34, %cst_28 {dimension_numbers = #tpu.dot_dimension_numbers<[1], [0], [0], [1], [0, 0, 1, 1], [], []>} : vector<16x64xf32>, vector<64x96xf32>, vector<16x96xf32> -> vector<16x96xf32>
    %36 = arith.addf %5, %35 : vector<16x96xf32>
    %cst_29 = arith.constant 0.000000e+00 : f32
    %37 = vector.broadcast %cst_29 : f32 to vector<16x96xf32>
    %38 = arith.maximumf %36, %37 : vector<16x96xf32>
    %c2_30 = arith.constant 2 : index
    %c0_31 = arith.constant 0 : index
    %c0_32 = arith.constant 0 : index
    %39 = vector.load %arg5[%c2_30, %c0_31, %c0_32] : memref<4x96x64xf32, #tpu.memory_space<vmem>>, vector<1x96x64xf32>
    %40 = vector.shape_cast %39 : vector<1x96x64xf32> to vector<96x64xf32>
    %cst_33 = arith.constant dense<0.000000e+00> : vector<16x64xf32>
    %41 = tpu.matmul %38, %40, %cst_33 {dimension_numbers = #tpu.dot_dimension_numbers<[1], [0], [0], [1], [0, 0, 1, 1], [], []>} : vector<16x96xf32>, vector<96x64xf32>, vector<16x64xf32> -> vector<16x64xf32>
    %c2_34 = arith.constant 2 : index
    %c0_35 = arith.constant 0 : index
    %c0_36 = arith.constant 0 : index
    %42 = vector.load %arg6[%c2_34, %c0_35, %c0_36] : memref<4x1x64xf32, #tpu.memory_space<vmem>>, vector<1x1x64xf32>
    %43 = vector.shape_cast %42 : vector<1x1x64xf32> to vector<1x64xf32>
    %44 = vector.broadcast %43 : vector<1x64xf32> to vector<16x64xf32>
    %45 = arith.addf %41, %44 : vector<16x64xf32>
    %cst_37 = arith.constant 0.000000e+00 : f32
    %46 = vector.broadcast %cst_37 : f32 to vector<16x64xf32>
    %47 = arith.maximumf %45, %46 : vector<16x64xf32>
    %48 = arith.addf %32, %47 : vector<16x64xf32>
    %c3 = arith.constant 3 : index
    %c0_38 = arith.constant 0 : index
    %c0_39 = arith.constant 0 : index
    %49 = vector.load %arg4[%c3, %c0_38, %c0_39] : memref<4x64x96xf32, #tpu.memory_space<vmem>>, vector<1x64x96xf32>
    %50 = vector.shape_cast %49 : vector<1x64x96xf32> to vector<64x96xf32>
    %cst_40 = arith.constant dense<0.000000e+00> : vector<16x96xf32>
    %51 = tpu.matmul %48, %50, %cst_40 {dimension_numbers = #tpu.dot_dimension_numbers<[1], [0], [0], [1], [0, 0, 1, 1], [], []>} : vector<16x64xf32>, vector<64x96xf32>, vector<16x96xf32> -> vector<16x96xf32>
    %52 = arith.addf %5, %51 : vector<16x96xf32>
    %cst_41 = arith.constant 0.000000e+00 : f32
    %53 = vector.broadcast %cst_41 : f32 to vector<16x96xf32>
    %54 = arith.maximumf %52, %53 : vector<16x96xf32>
    %c3_42 = arith.constant 3 : index
    %c0_43 = arith.constant 0 : index
    %c0_44 = arith.constant 0 : index
    %55 = vector.load %arg5[%c3_42, %c0_43, %c0_44] : memref<4x96x64xf32, #tpu.memory_space<vmem>>, vector<1x96x64xf32>
    %56 = vector.shape_cast %55 : vector<1x96x64xf32> to vector<96x64xf32>
    %cst_45 = arith.constant dense<0.000000e+00> : vector<16x64xf32>
    %57 = tpu.matmul %54, %56, %cst_45 {dimension_numbers = #tpu.dot_dimension_numbers<[1], [0], [0], [1], [0, 0, 1, 1], [], []>} : vector<16x96xf32>, vector<96x64xf32>, vector<16x64xf32> -> vector<16x64xf32>
    %c3_46 = arith.constant 3 : index
    %c0_47 = arith.constant 0 : index
    %c0_48 = arith.constant 0 : index
    %58 = vector.load %arg6[%c3_46, %c0_47, %c0_48] : memref<4x1x64xf32, #tpu.memory_space<vmem>>, vector<1x1x64xf32>
    %59 = vector.shape_cast %58 : vector<1x1x64xf32> to vector<1x64xf32>
    %60 = vector.broadcast %59 : vector<1x64xf32> to vector<16x64xf32>
    %61 = arith.addf %57, %60 : vector<16x64xf32>
    %cst_49 = arith.constant 0.000000e+00 : f32
    %62 = vector.broadcast %cst_49 : f32 to vector<16x64xf32>
    %63 = arith.maximumf %61, %62 : vector<16x64xf32>
    %64 = arith.addf %48, %63 : vector<16x64xf32>
    %c0_50 = arith.constant 0 : index
    %c0_51 = arith.constant 0 : index
    %65 = vector.load %arg7[%c0_50, %c0_51] : memref<64x128xf32, #tpu.memory_space<vmem>>, vector<64x128xf32>
    %cst_52 = arith.constant dense<0.000000e+00> : vector<16x128xf32>
    %66 = tpu.matmul %64, %65, %cst_52 {dimension_numbers = #tpu.dot_dimension_numbers<[1], [0], [0], [1], [0, 0, 1, 1], [], []>} : vector<16x64xf32>, vector<64x128xf32>, vector<16x128xf32> -> vector<16x128xf32>
    %c0_53 = arith.constant 0 : index
    %c0_54 = arith.constant 0 : index
    %67 = vector.load %arg8[%c0_53, %c0_54] : memref<1x128xf32, #tpu.memory_space<vmem>>, vector<1x128xf32>
    %68 = vector.broadcast %67 : vector<1x128xf32> to vector<16x128xf32>
    %69 = arith.addf %66, %68 : vector<16x128xf32>
    %cst_55 = arith.constant 0.000000e+00 : f32
    %70 = vector.broadcast %cst_55 : f32 to vector<16x128xf32>
    %71 = arith.maximumf %69, %70 : vector<16x128xf32>
    %c0_56 = arith.constant 0 : index
    %c0_57 = arith.constant 0 : index
    %72 = vector.load %arg9[%c0_56, %c0_57] : memref<128x128xf32, #tpu.memory_space<vmem>>, vector<128x128xf32>
    %cst_58 = arith.constant dense<0.000000e+00> : vector<16x128xf32>
    %73 = tpu.matmul %71, %72, %cst_58 {dimension_numbers = #tpu.dot_dimension_numbers<[1], [0], [0], [1], [0, 0, 1, 1], [], []>} : vector<16x128xf32>, vector<128x128xf32>, vector<16x128xf32> -> vector<16x128xf32>
    %c0_59 = arith.constant 0 : index
    %c0_60 = arith.constant 0 : index
    %74 = vector.load %arg10[%c0_59, %c0_60] : memref<1x128xf32, #tpu.memory_space<vmem>>, vector<1x128xf32>
    %75 = vector.broadcast %74 : vector<1x128xf32> to vector<16x128xf32>
    %76 = arith.addf %73, %75 : vector<16x128xf32>
    %cst_61 = arith.constant 0.000000e+00 : f32
    %77 = vector.broadcast %cst_61 : f32 to vector<16x128xf32>
    %78 = arith.maximumf %76, %77 : vector<16x128xf32>
    %c0_62 = arith.constant 0 : index
    %c0_63 = arith.constant 0 : index
    %79 = vector.load %arg11[%c0_62, %c0_63] : memref<128x128xf32, #tpu.memory_space<vmem>>, vector<128x128xf32>
    %cst_64 = arith.constant dense<0.000000e+00> : vector<16x128xf32>
    %80 = tpu.matmul %78, %79, %cst_64 {dimension_numbers = #tpu.dot_dimension_numbers<[1], [0], [0], [1], [0, 0, 1, 1], [], []>} : vector<16x128xf32>, vector<128x128xf32>, vector<16x128xf32> -> vector<16x128xf32>
    %c0_65 = arith.constant 0 : index
    %c0_66 = arith.constant 0 : index
    %81 = vector.load %arg12[%c0_65, %c0_66] : memref<1x128xf32, #tpu.memory_space<vmem>>, vector<1x128xf32>
    %82 = vector.broadcast %81 : vector<1x128xf32> to vector<16x128xf32>
    %83 = arith.addf %80, %82 : vector<16x128xf32>
    %cst_67 = arith.constant 0.000000e+00 : f32
    %84 = vector.broadcast %cst_67 : f32 to vector<16x128xf32>
    %85 = arith.maximumf %83, %84 : vector<16x128xf32>
    %c0_68 = arith.constant 0 : index
    %c0_69 = arith.constant 0 : index
    %86 = vector.load %arg13[%c0_68, %c0_69] : memref<128x1xf32, #tpu.memory_space<vmem>>, vector<128x1xf32>
    %cst_70 = arith.constant dense<0.000000e+00> : vector<16x1xf32>
    %87 = tpu.matmul %85, %86, %cst_70 {dimension_numbers = #tpu.dot_dimension_numbers<[1], [0], [0], [1], [0, 0, 1, 1], [], []>} : vector<16x128xf32>, vector<128x1xf32>, vector<16x1xf32> -> vector<16x1xf32>
    %c0_71 = arith.constant 0 : index
    %c0_72 = arith.constant 0 : index
    %88 = vector.load %arg14[%c0_71, %c0_72] : memref<1x1xf32, #tpu.memory_space<vmem>>, vector<1x1xf32>
    %89 = vector.broadcast %88 : vector<1x1xf32> to vector<16x1xf32>
    %90 = arith.addf %87, %89 : vector<16x1xf32>
    %c0_73 = arith.constant 0 : index
    %c0_74 = arith.constant 0 : index
    %91 = vector.load %arg15[%c0_73, %c0_74] : memref<16x1xf32, #tpu.memory_space<vmem>>, vector<16x1xf32>
    tpu.vector_store %arg15[%c0_73, %c0_74], %90 {strides = array<i32>} : memref<16x1xf32, #tpu.memory_space<vmem>>, vector<16x1xf32>,
    return
  }
  func.func @transform_0(%arg0: i32) -> (i32, i32) {
    %c0_i32 = arith.constant 0 : i32
    %c0_i32_0 = arith.constant 0 : i32
    return %arg0, %c0_i32 : i32, i32
  }
  func.func @transform_1(%arg0: i32) -> (i32, i32) {
    %c0_i32 = arith.constant 0 : i32
    %c0_i32_0 = arith.constant 0 : i32
    %c0_i32_1 = arith.constant 0 : i32
    return %c0_i32, %c0_i32_0 : i32, i32
  }
  func.func @transform_2(%arg0: i32) -> (i32, i32) {
    %c0_i32 = arith.constant 0 : i32
    %c0_i32_0 = arith.constant 0 : i32
    %c0_i32_1 = arith.constant 0 : i32
    return %c0_i32, %c0_i32_0 : i32, i32
  }
  func.func @transform_3(%arg0: i32) -> (i32, i32, i32) {
    %c0_i32 = arith.constant 0 : i32
    %c0_i32_0 = arith.constant 0 : i32
    %c0_i32_1 = arith.constant 0 : i32
    %c0_i32_2 = arith.constant 0 : i32
    return %c0_i32, %c0_i32_0, %c0_i32_1 : i32, i32, i32
  }
  func.func @transform_4(%arg0: i32) -> (i32, i32, i32) {
    %c0_i32 = arith.constant 0 : i32
    %c0_i32_0 = arith.constant 0 : i32
    %c0_i32_1 = arith.constant 0 : i32
    %c0_i32_2 = arith.constant 0 : i32
    return %c0_i32, %c0_i32_0, %c0_i32_1 : i32, i32, i32
  }
  func.func @transform_5(%arg0: i32) -> (i32, i32, i32) {
    %c0_i32 = arith.constant 0 : i32
    %c0_i32_0 = arith.constant 0 : i32
    %c0_i32_1 = arith.constant 0 : i32
    %c0_i32_2 = arith.constant 0 : i32
    return %c0_i32, %c0_i32_0, %c0_i32_1 : i32, i32, i32
  }
  func.func @transform_6(%arg0: i32) -> (i32, i32) {
    %c0_i32 = arith.constant 0 : i32
    %c0_i32_0 = arith.constant 0 : i32
    %c0_i32_1 = arith.constant 0 : i32
    return %c0_i32, %c0_i32_0 : i32, i32
  }
  func.func @transform_7(%arg0: i32) -> (i32, i32) {
    %c0_i32 = arith.constant 0 : i32
    %c0_i32_0 = arith.constant 0 : i32
    %c0_i32_1 = arith.constant 0 : i32
    return %c0_i32, %c0_i32_0 : i32, i32
  }
  func.func @transform_8(%arg0: i32) -> (i32, i32) {
    %c0_i32 = arith.constant 0 : i32
    %c0_i32_0 = arith.constant 0 : i32
    %c0_i32_1 = arith.constant 0 : i32
    return %c0_i32, %c0_i32_0 : i32, i32
  }
  func.func @transform_9(%arg0: i32) -> (i32, i32) {
    %c0_i32 = arith.constant 0 : i32
    %c0_i32_0 = arith.constant 0 : i32
    %c0_i32_1 = arith.constant 0 : i32
    return %c0_i32, %c0_i32_0 : i32, i32
  }
  func.func @transform_10(%arg0: i32) -> (i32, i32) {
    %c0_i32 = arith.constant 0 : i32
    %c0_i32_0 = arith.constant 0 : i32
    %c0_i32_1 = arith.constant 0 : i32
    return %c0_i32, %c0_i32_0 : i32, i32
  }
  func.func @transform_11(%arg0: i32) -> (i32, i32) {
    %c0_i32 = arith.constant 0 : i32
    %c0_i32_0 = arith.constant 0 : i32
    %c0_i32_1 = arith.constant 0 : i32
    return %c0_i32, %c0_i32_0 : i32, i32
  }
  func.func @transform_12(%arg0: i32) -> (i32, i32) {
    %c0_i32 = arith.constant 0 : i32
    %c0_i32_0 = arith.constant 0 : i32
    %c0_i32_1 = arith.constant 0 : i32
    return %c0_i32, %c0_i32_0 : i32, i32
  }
  func.func @transform_13(%arg0: i32) -> (i32, i32) {
    %c0_i32 = arith.constant 0 : i32
    %c0_i32_0 = arith.constant 0 : i32
    %c0_i32_1 = arith.constant 0 : i32
    return %c0_i32, %c0_i32_0 : i32, i32
  }
  func.func @transform_14(%arg0: i32) -> (i32, i32) {
    %c0_i32 = arith.constant 0 : i32
    %c0_i32_0 = arith.constant 0 : i32
    return %arg0, %c0_i32 : i32, i32
  }
}

</mosaic_0001>

<llo_original>
// kernel: nrdf_forward.1
$region0: #{nrdf_forward.1}
  #allocation0 [shape = 'u32[]', space=smem, size = 0x4, offset = 0x4, fixed_abs, tag = 'smem constant byte address 0x4 - core index']
  #allocation1 [shape = 'u32[144,128]{1,0:T(1,128)}', space=vmem, size = 0x12000, scoped, tag = 'internal scratch']
  #allocation2 [shape = 'f32[1,1]{1,0:T(1,128)S(1)}', space=vmem, size = 0x200, scoped, tag = 'scoped memory for nrdf_forward.1']
  %s0 = inlined_call_operand.vmem [shape: f32[16,32], index: 0, kind: input, shape index: {}]
  %s1 = inlined_call_operand.vmem [shape: f32[32,96], index: 1, kind: input, shape index: {}]
  %s2 = inlined_call_operand.vmem [shape: f32[1,96], index: 2, kind: input, shape index: {}]
  %s3 = inlined_call_operand.vmem [shape: f32[4,64,96], index: 3, kind: input, shape index: {}]
  %s4 = inlined_call_operand.vmem [shape: f32[4,96,64], index: 4, kind: input, shape index: {}]
  %s5 = inlined_call_operand.vmem [shape: f32[4,1,64], index: 5, kind: input, shape index: {}]
  %s6 = inlined_call_operand.vmem [shape: f32[64,128], index: 6, kind: input, shape index: {}]
  %s7 = inlined_call_operand.vmem [shape: f32[1,128], index: 7, kind: input, shape index: {}]
  %s8 = inlined_call_operand.vmem [shape: f32[128,128], index: 8, kind: input, shape index: {}]
  %s9 = inlined_call_operand.vmem [shape: f32[1,128], index: 9, kind: input, shape index: {}]
  %s10 = inlined_call_operand.vmem [shape: f32[128,128], index: 10, kind: input, shape index: {}]
  %s11 = inlined_call_operand.vmem [shape: f32[1,128], index: 11, kind: input, shape index: {}]
  %s12 = inlined_call_operand.vmem [shape: f32[128,1], index: 12, kind: input, shape index: {}]
  %s13 = inlined_call_operand.<no memory space> [shape: f32[1,1], index: 13, kind: input, shape index: {}]
  %s14 = inlined_call_operand.vmem [shape: f32[16,1], index: 14, kind: output, shape index: {}]
  %s15 = sld [smem:[#allocation0]]
  $region66: #{nrdf_forward.1} parent=0
    _
  %s17 = ssub.s32 1, %s15
  %s18 = scalar_select 0, %s17, %s15
  %v19 = vstv %s13
  %20 = vst [vmem:[#allocation2] sm:$0x1] %v19
  // Predicated region
  $region2: #{nrdf_forward.1} parent=0 // pred_check
    _
  $region3: #{nrdf_forward.1} parent=0 // pred_check_branch
    %22 = sbr.rel (0) target = $region5
  $region4: #{nrdf_forward.1} parent=0 // pred_region
    _
  $region5: #{nrdf_forward.1} parent=0 // pred_fallthru
    _
  // Predicated region
  $region6: #{nrdf_forward.1} parent=0 // pred_check
    _
  $region7: #{nrdf_forward.1} parent=0 // pred_check_branch
    %24 = sbr.rel (0) target = $region9
  $region8: #{nrdf_forward.1} parent=0 // pred_region
    _
  $region9: #{nrdf_forward.1} parent=0 // pred_fallthru
    _
  // Predicated region
  $region10: #{nrdf_forward.1} parent=0 // pred_check
    _
  $region11: #{nrdf_forward.1} parent=0 // pred_check_branch
    %26 = sbr.rel (0) target = $region13
  $region12: #{nrdf_forward.1} parent=0 // pred_region
    _
  $region13: #{nrdf_forward.1} parent=0 // pred_fallthru
    _
  // Predicated region
  $region14: #{nrdf_forward.1} parent=0 // pred_check
    _
  $region15: #{nrdf_forward.1} parent=0 // pred_check_branch
    %28 = sbr.rel (0) target = $region17
  $region16: #{nrdf_forward.1} parent=0 // pred_region
    _
  $region17: #{nrdf_forward.1} parent=0 // pred_fallthru
    _
  // Predicated region
  $region18: #{nrdf_forward.1} parent=0 // pred_check
    _
  $region19: #{nrdf_forward.1} parent=0 // pred_check_branch
    %30 = sbr.rel (0) target = $region21
  $region20: #{nrdf_forward.1} parent=0 // pred_region
    _
  $region21: #{nrdf_forward.1} parent=0 // pred_fallthru
    _
  // Predicated region
  $region22: #{nrdf_forward.1} parent=0 // pred_check
    _
  $region23: #{nrdf_forward.1} parent=0 // pred_check_branch
    %32 = sbr.rel (0) target = $region25
  $region24: #{nrdf_forward.1} parent=0 // pred_region
    _
  $region25: #{nrdf_forward.1} parent=0 // pred_fallthru
    _
  // Predicated region
  $region26: #{nrdf_forward.1} parent=0 // pred_check
    _
  $region27: #{nrdf_forward.1} parent=0 // pred_check_branch
    %34 = sbr.rel (0) target = $region29
  $region28: #{nrdf_forward.1} parent=0 // pred_region
    _
  $region29: #{nrdf_forward.1} parent=0 // pred_fallthru
    _
  // Predicated region
  $region30: #{nrdf_forward.1} parent=0 // pred_check
    _
  $region31: #{nrdf_forward.1} parent=0 // pred_check_branch
    %36 = sbr.rel (0) target = $region33
  $region32: #{nrdf_forward.1} parent=0 // pred_region
    _
  $region33: #{nrdf_forward.1} parent=0 // pred_fallthru
    _
  // Predicated region
  $region34: #{nrdf_forward.1} parent=0 // pred_check
    _
  $region35: #{nrdf_forward.1} parent=0 // pred_check_branch
    %38 = sbr.rel (0) target = $region37
  $region36: #{nrdf_forward.1} parent=0 // pred_region
    _
  $region37: #{nrdf_forward.1} parent=0 // pred_fallthru
    _
  // Predicated region
  $region38: #{nrdf_forward.1} parent=0 // pred_check
    _
  $region39: #{nrdf_forward.1} parent=0 // pred_check_branch
    %40 = sbr.rel (0) target = $region41
  $region40: #{nrdf_forward.1} parent=0 // pred_region
    _
  $region41: #{nrdf_forward.1} parent=0 // pred_fallthru
    _
  // Predicated region
  $region42: #{nrdf_forward.1} parent=0 // pred_check
    _
  $region43: #{nrdf_forward.1} parent=0 // pred_check_branch
    %42 = sbr.rel (0) target = $region45
  $region44: #{nrdf_forward.1} parent=0 // pred_region
    _
  $region45: #{nrdf_forward.1} parent=0 // pred_fallthru
    _
  // Predicated region
  $region46: #{nrdf_forward.1} parent=0 // pred_check
    _
  $region47: #{nrdf_forward.1} parent=0 // pred_check_branch
    %44 = sbr.rel (0) target = $region49
  $region48: #{nrdf_forward.1} parent=0 // pred_region
    _
  $region49: #{nrdf_forward.1} parent=0 // pred_fallthru
    _
  // Predicated region
  $region50: #{nrdf_forward.1} parent=0 // pred_check
    _
  $region51: #{nrdf_forward.1} parent=0 // pred_check_branch
    %46 = sbr.rel (0) target = $region53
  $region52: #{nrdf_forward.1} parent=0 // pred_region
    _
  $region53: #{nrdf_forward.1} parent=0 // pred_fallthru
    _
  // Predicated region
  $region54: #{nrdf_forward.1} parent=0 // pred_check
    _
  $region55: #{nrdf_forward.1} parent=0 // pred_check_branch
    %48 = sbr.rel (0) target = $region57
  $region56: #{nrdf_forward.1} parent=0 // pred_region
    _
  $region57: #{nrdf_forward.1} parent=0 // pred_fallthru
    _
  %v49 = vld [vmem:[%s0] sm:$0xff]
  %v50 = vld [vmem:[%s0 + $0x8] sm:$0xff]
  %v51 = vld [vmem:[%s1] sm:$0xff]
  %v52 = vld [vmem:[%s1 + $0x8] sm:$0xff]
  %v53 = vld [vmem:[%s1 + $0x10] sm:$0xff]
  %v54 = vld [vmem:[%s1 + $0x18] sm:$0xff]
  %v55 = vld [vmem:[%s2] sm:$0x1]
  %v57 = vlaneseq
  %v58 = vshrl.u32 %v57, 7
  %v59 = vsub.s32 0, %v58
  %v60 = vrot.slane %v55, %v59
  %vm62 = vcmask 261120
  %v64 = vsel %vm62, %v49, 0
  %v67 = vsel %vm62, %v50, 0
  %69 = vmatprep.subr.mxu0 0.0
  %70 = vmatpush1.msra.mxu0 %v51
  %71 = vmatprep.subr.mxu0 0.0
  %72 = vmatpush1.msra.mxu0 %v52
  %73 = vmatprep.subr.mxu0 0.0
  %74 = vmatpush1.msra.mxu0 %v53
  %75 = vmatprep.subr.mxu0 0.0
  %76 = vmatpush1.msra.mxu0 %v54
  %77 = vmatprep.subr.mxu0 0.0
  %78 = vmatpush1.msra.mxu0 0.0
  %79 = vmatprep.subr.mxu0 0.0
  %80 = vmatpush1.msra.mxu0 0.0
  %81 = vmatprep.subr.mxu0 0.0
  %82 = vmatpush1.msra.mxu0 0.0
  %83 = vmatprep.subr.mxu0 0.0
  %84 = vmatpush1.msra.mxu0 0.0
  %85 = vmatprep.subr.mxu0 0.0
  %86 = vmatpush1.msra.mxu0 0.0
  %87 = vmatprep.subr.mxu0 0.0
  %88 = vmatpush1.msra.mxu0 0.0
  %89 = vmatprep.subr.mxu0 0.0
  %90 = vmatpush1.msra.mxu0 0.0
  %91 = vmatprep.subr.mxu0 0.0
  %92 = vmatpush1.msra.mxu0 0.0
  %93 = vmatprep.subr.mxu0 0.0
  %94 = vmatpush1.msra.mxu0 0.0
  %95 = vmatprep.subr.mxu0 0.0
  %96 = vmatpush1.msra.mxu0 0.0
  %97 = vmatprep.subr.mxu0 0.0
  %98 = vmatpush1.msra.mxu0 0.0
  %99 = vmatprep.subr.mxu0 0.0
  %100 = vmatpush1.msra.mxu0 0.0
  %101 = vmatprep.subr.mxu0 0.0
  %102 = vmatpush1.msra.mxu0 0.0
  %103 = vmatprep.subr.mxu0 0.0
  %104 = vmatpush1.msra.mxu0 0.0
  %105 = vmatprep.subr.mxu0 0.0
  %106 = vmatpush1.msra.mxu0 0.0
  %107 = vmatprep.subr.mxu0 0.0
  %108 = vmatpush1.msra.mxu0 0.0
  %109 = vmatprep.subr.mxu0 0.0
  %110 = vmatpush1.msra.mxu0 0.0
  %111 = vmatprep.subr.mxu0 0.0
  %112 = vmatpush1.msra.mxu0 0.0
  %113 = vmatprep.subr.mxu0 0.0
  %114 = vmatpush1.msra.mxu0 0.0
  %115 = vmatprep.subr.mxu0 0.0
  %116 = vmatpush1.msra.mxu0 0.0
  %117 = vmatprep.subr.mxu0 0.0
  %118 = vmatpush1.msra.mxu0 0.0
  %119 = vmatprep.subr.mxu0 0.0
  %120 = vmatpush1.msra.mxu0 0.0
  %121 = vmatprep.subr.mxu0 0.0
  %122 = vmatpush1.msra.mxu0 0.0
  %123 = vmatprep.subr.mxu0 0.0
  %124 = vmatpush1.msra.mxu0 0.0
  %125 = vmatprep.subr.mxu0 0.0
  %126 = vmatpush1.msra.mxu0 0.0
  %127 = vmatprep.subr.mxu0 0.0
  %128 = vmatpush1.msra.mxu0 0.0
  %129 = vmatprep.subr.mxu0 0.0
  %130 = vmatpush1.msra.mxu0 0.0
  %131 = vmatprep.subr.mxu0 0.0
  %132 = vmatpush1.msra.mxu0 0.0
  %133 = vmatprep.mubr.f32.mxu0 0.0
  %134 = vmatmul.mubr.f32.gmra.mrb[0].mxu0 %v64
  %v135 = vpop.f32.mrb[0].mxu0
  %v136 = vadd.f32 %v60, %v135
  %v137 = vpop.f32.mrb[0].mxu0
  %138 = vmatprep.mubr.f32.mxu0 0.0
  %139 = vmatmul.mubr.f32.gmra.mrb[0].mxu0 %v67
  %v140 = vpop.f32.mrb[0].mxu0
  %v141 = vadd.f32 %v60, %v140
  %v142 = vpop.f32.mrb[0].mxu0
  %143 = vdwg.mxu0
  %v144 = vmax.f32 %v136, 0.0
  %v145 = vmax.f32 %v141, 0.0
  %v146 = vld [vmem:[%s4] sm:$0xff]
  %v147 = vld [vmem:[%s4 + $0x8] sm:$0xff]
  %v148 = vld [vmem:[%s4 + $0x10] sm:$0xff]
  %v149 = vld [vmem:[%s4 + $0x18] sm:$0xff]
  %v150 = vld [vmem:[%s4 + $0x20] sm:$0xff]
  %v151 = vld [vmem:[%s4 + $0x28] sm:$0xff]
  %v152 = vld [vmem:[%s4 + $0x30] sm:$0xff]
  %v153 = vld [vmem:[%s4 + $0x38] sm:$0xff]
  %v154 = vld [vmem:[%s4 + $0x40] sm:$0xff]
  %v155 = vld [vmem:[%s4 + $0x48] sm:$0xff]
  %v156 = vld [vmem:[%s4 + $0x50] sm:$0xff]
  %v157 = vld [vmem:[%s4 + $0x58] sm:$0xff]
  %v158 = vld [vmem:[%s5] sm:$0x1]
  %v160 = vlaneseq
  %v161 = vshrl.u32 %v160, 7
  %v162 = vsub.s32 0, %v161
  %v163 = vrot.slane %v158, %v162
  %vm165 = vcmask 785408
  %v167 = vsel %vm165, %v144, 0
  %v170 = vsel %vm165, %v145, 0
  %172 = vmatprep.subr.mxu0 0.0
  %173 = vmatpush1.msra.mxu0 %v146
  %174 = vmatprep.subr.mxu0 0.0
  %175 = vmatpush1.msra.mxu0 %v147
  %176 = vmatprep.subr.mxu0 0.0
  %177 = vmatpush1.msra.mxu0 %v148
  %178 = vmatprep.subr.mxu0 0.0
  %179 = vmatpush1.msra.mxu0 %v149
  %180 = vmatprep.subr.mxu0 0.0
  %181 = vmatpush1.msra.mxu0 %v150
  %182 = vmatprep.subr.mxu0 0.0
  %183 = vmatpush1.msra.mxu0 %v151
  %184 = vmatprep.subr.mxu0 0.0
  %185 = vmatpush1.msra.mxu0 %v152
  %186 = vmatprep.subr.mxu0 0.0
  %187 = vmatpush1.msra.mxu0 %v153
  %188 = vmatprep.subr.mxu0 0.0
  %189 = vmatpush1.msra.mxu0 %v154
  %190 = vmatprep.subr.mxu0 0.0
  %191 = vmatpush1.msra.mxu0 %v155
  %192 = vmatprep.subr.mxu0 0.0
  %193 = vmatpush1.msra.mxu0 %v156
  %194 = vmatprep.subr.mxu0 0.0
  %195 = vmatpush1.msra.mxu0 %v157
  %196 = vmatprep.subr.mxu0 0.0
  %197 = vmatpush1.msra.mxu0 0.0
  %198 = vmatprep.subr.mxu0 0.0
  %199 = vmatpush1.msra.mxu0 0.0
  %200 = vmatprep.subr.mxu0 0.0
  %201 = vmatpush1.msra.mxu0 0.0
  %202 = vmatprep.subr.mxu0 0.0
  %203 = vmatpush1.msra.mxu0 0.0
  %204 = vmatprep.subr.mxu0 0.0
  %205 = vmatpush1.msra.mxu0 0.0
  %206 = vmatprep.subr.mxu0 0.0
  %207 = vmatpush1.msra.mxu0 0.0
  %208 = vmatprep.subr.mxu0 0.0
  %209 = vmatpush1.msra.mxu0 0.0
  %210 = vmatprep.subr.mxu0 0.0
  %211 = vmatpush1.msra.mxu0 0.0
  %212 = vmatprep.subr.mxu0 0.0
  %213 = vmatpush1.msra.mxu0 0.0
  %214 = vmatprep.subr.mxu0 0.0
  %215 = vmatpush1.msra.mxu0 0.0
  %216 = vmatprep.subr.mxu0 0.0
  %217 = vmatpush1.msra.mxu0 0.0
  %218 = vmatprep.subr.mxu0 0.0
  %219 = vmatpush1.msra.mxu0 0.0
  %220 = vmatprep.subr.mxu0 0.0
  %221 = vmatpush1.msra.mxu0 0.0
  %222 = vmatprep.subr.mxu0 0.0
  %223 = vmatpush1.msra.mxu0 0.0
  %224 = vmatprep.subr.mxu0 0.0
  %225 = vmatpush1.msra.mxu0 0.0
  %226 = vmatprep.subr.mxu0 0.0
  %227 = vmatpush1.msra.mxu0 0.0
  %228 = vmatprep.subr.mxu0 0.0
  %229 = vmatpush1.msra.mxu0 0.0
  %230 = vmatprep.subr.mxu0 0.0
  %231 = vmatpush1.msra.mxu0 0.0
  %232 = vmatprep.subr.mxu0 0.0
  %233 = vmatpush1.msra.mxu0 0.0
  %234 = vmatprep.subr.mxu0 0.0
  %235 = vmatpush1.msra.mxu0 0.0
  %236 = vmatprep.mubr.f32.mxu0 0.0
  %237 = vmatmul.mubr.f32.gmra.mrb[0].mxu0 %v167
  %v238 = vpop.f32.mrb[0].mxu0
  %v239 = vadd.f32 %v163, %v238
  %v240 = vpop.f32.mrb[0].mxu0
  %241 = vmatprep.mubr.f32.mxu0 0.0
  %242 = vmatmul.mubr.f32.gmra.mrb[0].mxu0 %v170
  %v243 = vpop.f32.mrb[0].mxu0
  %v244 = vadd.f32 %v163, %v243
  %v245 = vpop.f32.mrb[0].mxu0
  %246 = vdwg.mxu0
  %v247 = vmax.f32 %v239, 0.0
  %v248 = vmax.f32 %v244, 0.0
  %s249 = scalar_lea.vmem %s3, 64
  %v250 = vld [vmem:[%s249] sm:$0xff]
  %v251 = vld [vmem:[%s249 + $0x8] sm:$0xff]
  %v252 = vld [vmem:[%s249 + $0x10] sm:$0xff]
  %v253 = vld [vmem:[%s249 + $0x18] sm:$0xff]
  %v254 = vld [vmem:[%s249 + $0x20] sm:$0xff]
  %v255 = vld [vmem:[%s249 + $0x28] sm:$0xff]
  %v256 = vld [vmem:[%s249 + $0x30] sm:$0xff]
  %v257 = vld [vmem:[%s249 + $0x38] sm:$0xff]
  %vm258 = vcmask 523264
  %v260 = vsel %vm258, %v247, 0
  %v263 = vsel %vm258, %v248, 0
  %265 = vmatprep.subr.mxu0 0.0
  %266 = vmatpush1.msra.mxu0 %v250
  %267 = vmatprep.subr.mxu0 0.0
  %268 = vmatpush1.msra.mxu0 %v251
  %269 = vmatprep.subr.mxu0 0.0
  %270 = vmatpush1.msra.mxu0 %v252
  %271 = vmatprep.subr.mxu0 0.0
  %272 = vmatpush1.msra.mxu0 %v253
  %273 = vmatprep.subr.mxu0 0.0
  %274 = vmatpush1.msra.mxu0 %v254
  %275 = vmatprep.subr.mxu0 0.0
  %276 = vmatpush1.msra.mxu0 %v255
  %277 = vmatprep.subr.mxu0 0.0
  %278 = vmatpush1.msra.mxu0 %v256
  %279 = vmatprep.subr.mxu0 0.0
  %280 = vmatpush1.msra.mxu0 %v257
  %281 = vmatprep.subr.mxu0 0.0
  %282 = vmatpush1.msra.mxu0 0.0
  %283 = vmatprep.subr.mxu0 0.0
  %284 = vmatpush1.msra.mxu0 0.0
  %285 = vmatprep.subr.mxu0 0.0
  %286 = vmatpush1.msra.mxu0 0.0
  %287 = vmatprep.subr.mxu0 0.0
  %288 = vmatpush1.msra.mxu0 0.0
  %289 = vmatprep.subr.mxu0 0.0
  %290 = vmatpush1.msra.mxu0 0.0
  %291 = vmatprep.subr.mxu0 0.0
  %292 = vmatpush1.msra.mxu0 0.0
  %293 = vmatprep.subr.mxu0 0.0
  %294 = vmatpush1.msra.mxu0 0.0
  %295 = vmatprep.subr.mxu0 0.0
  %296 = vmatpush1.msra.mxu0 0.0
  %297 = vmatprep.subr.mxu0 0.0
  %298 = vmatpush1.msra.mxu0 0.0
  %299 = vmatprep.subr.mxu0 0.0
  %300 = vmatpush1.msra.mxu0 0.0
  %301 = vmatprep.subr.mxu0 0.0
  %302 = vmatpush1.msra.mxu0 0.0
  %303 = vmatprep.subr.mxu0 0.0
  %304 = vmatpush1.msra.mxu0 0.0
  %305 = vmatprep.subr.mxu0 0.0
  %306 = vmatpush1.msra.mxu0 0.0
  %307 = vmatprep.subr.mxu0 0.0
  %308 = vmatpush1.msra.mxu0 0.0
  %309 = vmatprep.subr.mxu0 0.0
  %310 = vmatpush1.msra.mxu0 0.0
  %311 = vmatprep.subr.mxu0 0.0
  %312 = vmatpush1.msra.mxu0 0.0
  %313 = vmatprep.subr.mxu0 0.0
  %314 = vmatpush1.msra.mxu0 0.0
  %315 = vmatprep.subr.mxu0 0.0
  %316 = vmatpush1.msra.mxu0 0.0
  %317 = vmatprep.subr.mxu0 0.0
  %318 = vmatpush1.msra.mxu0 0.0
  %319 = vmatprep.subr.mxu0 0.0
  %320 = vmatpush1.msra.mxu0 0.0
  %321 = vmatprep.subr.mxu0 0.0
  %322 = vmatpush1.msra.mxu0 0.0
  %323 = vmatprep.subr.mxu0 0.0
  %324 = vmatpush1.msra.mxu0 0.0
  %325 = vmatprep.subr.mxu0 0.0
  %326 = vmatpush1.msra.mxu0 0.0
  %327 = vmatprep.subr.mxu0 0.0
  %328 = vmatpush1.msra.mxu0 0.0
  %329 = vmatprep.mubr.f32.mxu0 0.0
  %330 = vmatmul.mubr.f32.gmra.mrb[0].mxu0 %v260
  %v331 = vpop.f32.mrb[0].mxu0
  %v332 = vadd.f32 0.0, %v331
  %v333 = vpop.f32.mrb[0].mxu0
  %334 = vmatprep.mubr.f32.mxu0 0.0
  %335 = vmatmul.mubr.f32.gmra.mrb[0].mxu0 %v263
  %v336 = vpop.f32.mrb[0].mxu0
  %v337 = vadd.f32 0.0, %v336
  %v338 = vpop.f32.mrb[0].mxu0
  %339 = vdwg.mxu0
  %v340 = vadd.f32 %v136, %v332
  %v341 = vadd.f32 %v141, %v337
  %v342 = vmax.f32 %v340, 0.0
  %v343 = vmax.f32 %v341, 0.0
  %s344 = scalar_lea.vmem %s4, 96
  %v345 = vld [vmem:[%s344] sm:$0xff]
  %v346 = vld [vmem:[%s344 + $0x8] sm:$0xff]
  %v347 = vld [vmem:[%s344 + $0x10] sm:$0xff]
  %v348 = vld [vmem:[%s344 + $0x18] sm:$0xff]
  %v349 = vld [vmem:[%s344 + $0x20] sm:$0xff]
  %v350 = vld [vmem:[%s344 + $0x28] sm:$0xff]
  %v351 = vld [vmem:[%s344 + $0x30] sm:$0xff]
  %v352 = vld [vmem:[%s344 + $0x38] sm:$0xff]
  %v353 = vld [vmem:[%s344 + $0x40] sm:$0xff]
  %v354 = vld [vmem:[%s344 + $0x48] sm:$0xff]
  %v355 = vld [vmem:[%s344 + $0x50] sm:$0xff]
  %v356 = vld [vmem:[%s344 + $0x58] sm:$0xff]
  %s357 = scalar_lea.vmem %s5, 1
  %v358 = vld [vmem:[%s357] sm:$0x1]
  %v360 = vlaneseq
  %v361 = vshrl.u32 %v360, 7
  %v362 = vsub.s32 0, %v361
  %v363 = vrot.slane %v358, %v362
  %v366 = vsel %vm165, %v342, 0
  %v369 = vsel %vm165, %v343, 0
  %371 = vmatprep.subr.mxu0 0.0
  %372 = vmatpush1.msra.mxu0 %v345
  %373 = vmatprep.subr.mxu0 0.0
  %374 = vmatpush1.msra.mxu0 %v346
  %375 = vmatprep.subr.mxu0 0.0
  %376 = vmatpush1.msra.mxu0 %v347
  %377 = vmatprep.subr.mxu0 0.0
  %378 = vmatpush1.msra.mxu0 %v348
  %379 = vmatprep.subr.mxu0 0.0
  %380 = vmatpush1.msra.mxu0 %v349
  %381 = vmatprep.subr.mxu0 0.0
  %382 = vmatpush1.msra.mxu0 %v350
  %383 = vmatprep.subr.mxu0 0.0
  %384 = vmatpush1.msra.mxu0 %v351
  %385 = vmatprep.subr.mxu0 0.0
  %386 = vmatpush1.msra.mxu0 %v352
  %387 = vmatprep.subr.mxu0 0.0
  %388 = vmatpush1.msra.mxu0 %v353
  %389 = vmatprep.subr.mxu0 0.0
  %390 = vmatpush1.msra.mxu0 %v354
  %391 = vmatprep.subr.mxu0 0.0
  %392 = vmatpush1.msra.mxu0 %v355
  %393 = vmatprep.subr.mxu0 0.0
  %394 = vmatpush1.msra.mxu0 %v356
  %395 = vmatprep.subr.mxu0 0.0
  %396 = vmatpush1.msra.mxu0 0.0
  %397 = vmatprep.subr.mxu0 0.0
  %398 = vmatpush1.msra.mxu0 0.0
  %399 = vmatprep.subr.mxu0 0.0
  %400 = vmatpush1.msra.mxu0 0.0
  %401 = vmatprep.subr.mxu0 0.0
  %402 = vmatpush1.msra.mxu0 0.0
  %403 = vmatprep.subr.mxu0 0.0
  %404 = vmatpush1.msra.mxu0 0.0
  %405 = vmatprep.subr.mxu0 0.0
  %406 = vmatpush1.msra.mxu0 0.0
  %407 = vmatprep.subr.mxu0 0.0
  %408 = vmatpush1.msra.mxu0 0.0
  %409 = vmatprep.subr.mxu0 0.0
  %410 = vmatpush1.msra.mxu0 0.0
  %411 = vmatprep.subr.mxu0 0.0
  %412 = vmatpush1.msra.mxu0 0.0
  %413 = vmatprep.subr.mxu0 0.0
  %414 = vmatpush1.msra.mxu0 0.0
  %415 = vmatprep.subr.mxu0 0.0
  %416 = vmatpush1.msra.mxu0 0.0
  %417 = vmatprep.subr.mxu0 0.0
  %418 = vmatpush1.msra.mxu0 0.0
  %419 = vmatprep.subr.mxu0 0.0
  %420 = vmatpush1.msra.mxu0 0.0
  %421 = vmatprep.subr.mxu0 0.0
  %422 = vmatpush1.msra.mxu0 0.0
  %423 = vmatprep.subr.mxu0 0.0
  %424 = vmatpush1.msra.mxu0 0.0
  %425 = vmatprep.subr.mxu0 0.0
  %426 = vmatpush1.msra.mxu0 0.0
  %427 = vmatprep.subr.mxu0 0.0
  %428 = vmatpush1.msra.mxu0 0.0
  %429 = vmatprep.subr.mxu0 0.0
  %430 = vmatpush1.msra.mxu0 0.0
  %431 = vmatprep.subr.mxu0 0.0
  %432 = vmatpush1.msra.mxu0 0.0
  %433 = vmatprep.subr.mxu0 0.0
  %434 = vmatpush1.msra.mxu0 0.0
  %435 = vmatprep.mubr.f32.mxu0 0.0
  %436 = vmatmul.mubr.f32.gmra.mrb[0].mxu0 %v366
  %v437 = vpop.f32.mrb[0].mxu0
  %v438 = vadd.f32 %v363, %v437
  %v439 = vpop.f32.mrb[0].mxu0
  %440 = vmatprep.mubr.f32.mxu0 0.0
  %441 = vmatmul.mubr.f32.gmra.mrb[0].mxu0 %v369
  %v442 = vpop.f32.mrb[0].mxu0
  %v443 = vadd.f32 %v363, %v442
  %v444 = vpop.f32.mrb[0].mxu0
  %445 = vdwg.mxu0
  %v446 = vmax.f32 %v438, 0.0
  %v447 = vmax.f32 %v443, 0.0
  %v448 = vadd.f32 %v247, %v446
  %v449 = vadd.f32 %v248, %v447
  %s450 = scalar_lea.vmem %s3, 128
  %v451 = vld [vmem:[%s450] sm:$0xff]
  %v452 = vld [vmem:[%s450 + $0x8] sm:$0xff]
  %v453 = vld [vmem:[%s450 + $0x10] sm:$0xff]
  %v454 = vld [vmem:[%s450 + $0x18] sm:$0xff]
  %v455 = vld [vmem:[%s450 + $0x20] sm:$0xff]
  %v456 = vld [vmem:[%s450 + $0x28] sm:$0xff]
  %v457 = vld [vmem:[%s450 + $0x30] sm:$0xff]
  %v458 = vld [vmem:[%s450 + $0x38] sm:$0xff]
  %v460 = vsel %vm258, %v448, 0
  %v463 = vsel %vm258, %v449, 0
  %465 = vmatprep.subr.mxu0 0.0
  %466 = vmatpush1.msra.mxu0 %v451
  %467 = vmatprep.subr.mxu0 0.0
  %468 = vmatpush1.msra.mxu0 %v452
  %469 = vmatprep.subr.mxu0 0.0
  %470 = vmatpush1.msra.mxu0 %v453
  %471 = vmatprep.subr.mxu0 0.0
  %472 = vmatpush1.msra.mxu0 %v454
  %473 = vmatprep.subr.mxu0 0.0
  %474 = vmatpush1.msra.mxu0 %v455
  %475 = vmatprep.subr.mxu0 0.0
  %476 = vmatpush1.msra.mxu0 %v456
  %477 = vmatprep.subr.mxu0 0.0
  %478 = vmatpush1.msra.mxu0 %v457
  %479 = vmatprep.subr.mxu0 0.0
  %480 = vmatpush1.msra.mxu0 %v458
  %481 = vmatprep.subr.mxu0 0.0
  %482 = vmatpush1.msra.mxu0 0.0
  %483 = vmatprep.subr.mxu0 0.0
  %484 = vmatpush1.msra.mxu0 0.0
  %485 = vmatprep.subr.mxu0 0.0
  %486 = vmatpush1.msra.mxu0 0.0
  %487 = vmatprep.subr.mxu0 0.0
  %488 = vmatpush1.msra.mxu0 0.0
  %489 = vmatprep.subr.mxu0 0.0
  %490 = vmatpush1.msra.mxu0 0.0
  %491 = vmatprep.subr.mxu0 0.0
  %492 = vmatpush1.msra.mxu0 0.0
  %493 = vmatprep.subr.mxu0 0.0
  %494 = vmatpush1.msra.mxu0 0.0
  %495 = vmatprep.subr.mxu0 0.0
  %496 = vmatpush1.msra.mxu0 0.0
  %497 = vmatprep.subr.mxu0 0.0
  %498 = vmatpush1.msra.mxu0 0.0
  %499 = vmatprep.subr.mxu0 0.0
  %500 = vmatpush1.msra.mxu0 0.0
  %501 = vmatprep.subr.mxu0 0.0
  %502 = vmatpush1.msra.mxu0 0.0
  %503 = vmatprep.subr.mxu0 0.0
  %504 = vmatpush1.msra.mxu0 0.0
  %505 = vmatprep.subr.mxu0 0.0
  %506 = vmatpush1.msra.mxu0 0.0
  %507 = vmatprep.subr.mxu0 0.0
  %508 = vmatpush1.msra.mxu0 0.0
  %509 = vmatprep.subr.mxu0 0.0
  %510 = vmatpush1.msra.mxu0 0.0
  %511 = vmatprep.subr.mxu0 0.0
  %512 = vmatpush1.msra.mxu0 0.0
  %513 = vmatprep.subr.mxu0 0.0
  %514 = vmatpush1.msra.mxu0 0.0
  %515 = vmatprep.subr.mxu0 0.0
  %516 = vmatpush1.msra.mxu0 0.0
  %517 = vmatprep.subr.mxu0 0.0
  %518 = vmatpush1.msra.mxu0 0.0
  %519 = vmatprep.subr.mxu0 0.0
  %520 = vmatpush1.msra.mxu0 0.0
  %521 = vmatprep.subr.mxu0 0.0
  %522 = vmatpush1.msra.mxu0 0.0
  %523 = vmatprep.subr.mxu0 0.0
  %524 = vmatpush1.msra.mxu0 0.0
  %525 = vmatprep.subr.mxu0 0.0
  %526 = vmatpush1.msra.mxu0 0.0
  %527 = vmatprep.subr.mxu0 0.0
  %528 = vmatpush1.msra.mxu0 0.0
  %529 = vmatprep.mubr.f32.mxu0 0.0
  %530 = vmatmul.mubr.f32.gmra.mrb[0].mxu0 %v460
  %v531 = vpop.f32.mrb[0].mxu0
  %v532 = vadd.f32 0.0, %v531
  %v533 = vpop.f32.mrb[0].mxu0
  %534 = vmatprep.mubr.f32.mxu0 0.0
  %535 = vmatmul.mubr.f32.gmra.mrb[0].mxu0 %v463
  %v536 = vpop.f32.mrb[0].mxu0
  %v537 = vadd.f32 0.0, %v536
  %v538 = vpop.f32.mrb[0].mxu0
  %539 = vdwg.mxu0
  %v540 = vadd.f32 %v136, %v532
  %v541 = vadd.f32 %v141, %v537
  %v542 = vmax.f32 %v540, 0.0
  %v543 = vmax.f32 %v541, 0.0
  %s544 = scalar_lea.vmem %s4, 192
  %v545 = vld [vmem:[%s544] sm:$0xff]
  %v546 = vld [vmem:[%s544 + $0x8] sm:$0xff]
  %v547 = vld [vmem:[%s544 + $0x10] sm:$0xff]
  %v548 = vld [vmem:[%s544 + $0x18] sm:$0xff]
  %v549 = vld [vmem:[%s544 + $0x20] sm:$0xff]
  %v550 = vld [vmem:[%s544 + $0x28] sm:$0xff]
  %v551 = vld [vmem:[%s544 + $0x30] sm:$0xff]
  %v552 = vld [vmem:[%s544 + $0x38] sm:$0xff]
  %v553 = vld [vmem:[%s544 + $0x40] sm:$0xff]
  %v554 = vld [vmem:[%s544 + $0x48] sm:$0xff]
  %v555 = vld [vmem:[%s544 + $0x50] sm:$0xff]
  %v556 = vld [vmem:[%s544 + $0x58] sm:$0xff]
  %s557 = scalar_lea.vmem %s5, 2
  %v558 = vld [vmem:[%s557] sm:$0x1]
  %v560 = vlaneseq
  %v561 = vshrl.u32 %v560, 7
  %v562 = vsub.s32 0, %v561
  %v563 = vrot.slane %v558, %v562
  %v566 = vsel %vm165, %v542, 0
  %v569 = vsel %vm165, %v543, 0
  %571 = vmatprep.subr.mxu0 0.0
  %572 = vmatpush1.msra.mxu0 %v545
  %573 = vmatprep.subr.mxu0 0.0
  %574 = vmatpush1.msra.mxu0 %v546
  %575 = vmatprep.subr.mxu0 0.0
  %576 = vmatpush1.msra.mxu0 %v547
  %577 = vmatprep.subr.mxu0 0.0
  %578 = vmatpush1.msra.mxu0 %v548
  %579 = vmatprep.subr.mxu0 0.0
  %580 = vmatpush1.msra.mxu0 %v549
  %581 = vmatprep.subr.mxu0 0.0
  %582 = vmatpush1.msra.mxu0 %v550
  %583 = vmatprep.subr.mxu0 0.0
  %584 = vmatpush1.msra.mxu0 %v551
  %585 = vmatprep.subr.mxu0 0.0
  %586 = vmatpush1.msra.mxu0 %v552
  %587 = vmatprep.subr.mxu0 0.0
  %588 = vmatpush1.msra.mxu0 %v553
  %589 = vmatprep.subr.mxu0 0.0
  %590 = vmatpush1.msra.mxu0 %v554
  %591 = vmatprep.subr.mxu0 0.0
  %592 = vmatpush1.msra.mxu0 %v555
  %593 = vmatprep.subr.mxu0 0.0
  %594 = vmatpush1.msra.mxu0 %v556
  %595 = vmatprep.subr.mxu0 0.0
  %596 = vmatpush1.msra.mxu0 0.0
  %597 = vmatprep.subr.mxu0 0.0
  %598 = vmatpush1.msra.mxu0 0.0
  %599 = vmatprep.subr.mxu0 0.0
  %600 = vmatpush1.msra.mxu0 0.0
  %601 = vmatprep.subr.mxu0 0.0
  %602 = vmatpush1.msra.mxu0 0.0
  %603 = vmatprep.subr.mxu0 0.0
  %604 = vmatpush1.msra.mxu0 0.0
  %605 = vmatprep.subr.mxu0 0.0
  %606 = vmatpush1.msra.mxu0 0.0
  %607 = vmatprep.subr.mxu0 0.0
  %608 = vmatpush1.msra.mxu0 0.0
  %609 = vmatprep.subr.mxu0 0.0
  %610 = vmatpush1.msra.mxu0 0.0
  %611 = vmatprep.subr.mxu0 0.0
  %612 = vmatpush1.msra.mxu0 0.0
  %613 = vmatprep.subr.mxu0 0.0
  %614 = vmatpush1.msra.mxu0 0.0
  %615 = vmatprep.subr.mxu0 0.0
  %616 = vmatpush1.msra.mxu0 0.0
  %617 = vmatprep.subr.mxu0 0.0
  %618 = vmatpush1.msra.mxu0 0.0
  %619 = vmatprep.subr.mxu0 0.0
  %620 = vmatpush1.msra.mxu0 0.0
  %621 = vmatprep.subr.mxu0 0.0
  %622 = vmatpush1.msra.mxu0 0.0
  %623 = vmatprep.subr.mxu0 0.0
  %624 = vmatpush1.msra.mxu0 0.0
  %625 = vmatprep.subr.mxu0 0.0
  %626 = vmatpush1.msra.mxu0 0.0
  %627 = vmatprep.subr.mxu0 0.0
  %628 = vmatpush1.msra.mxu0 0.0
  %629 = vmatprep.subr.mxu0 0.0
  %630 = vmatpush1.msra.mxu0 0.0
  %631 = vmatprep.subr.mxu0 0.0
  %632 = vmatpush1.msra.mxu0 0.0
  %633 = vmatprep.subr.mxu0 0.0
  %634 = vmatpush1.msra.mxu0 0.0
  %635 = vmatprep.mubr.f32.mxu0 0.0
  %636 = vmatmul.mubr.f32.gmra.mrb[0].mxu0 %v566
  %v637 = vpop.f32.mrb[0].mxu0
  %v638 = vadd.f32 %v563, %v637
  %v639 = vpop.f32.mrb[0].mxu0
  %640 = vmatprep.mubr.f32.mxu0 0.0
  %641 = vmatmul.mubr.f32.gmra.mrb[0].mxu0 %v569
  %v642 = vpop.f32.mrb[0].mxu0
  %v643 = vadd.f32 %v563, %v642
  %v644 = vpop.f32.mrb[0].mxu0
  %645 = vdwg.mxu0
  %v646 = vmax.f32 %v638, 0.0
  %v647 = vmax.f32 %v643, 0.0
  %v648 = vadd.f32 %v448, %v646
  %v649 = vadd.f32 %v449, %v647
  %s650 = scalar_lea.vmem %s3, 192
  %v651 = vld [vmem:[%s650] sm:$0xff]
  %v652 = vld [vmem:[%s650 + $0x8] sm:$0xff]
  %v653 = vld [vmem:[%s650 + $0x10] sm:$0xff]
  %v654 = vld [vmem:[%s650 + $0x18] sm:$0xff]
  %v655 = vld [vmem:[%s650 + $0x20] sm:$0xff]
  %v656 = vld [vmem:[%s650 + $0x28] sm:$0xff]
  %v657 = vld [vmem:[%s650 + $0x30] sm:$0xff]
  %v658 = vld [vmem:[%s650 + $0x38] sm:$0xff]
  %v660 = vsel %vm258, %v648, 0
  %v663 = vsel %vm258, %v649, 0
  %665 = vmatprep.subr.mxu0 0.0
  %666 = vmatpush1.msra.mxu0 %v651
  %667 = vmatprep.subr.mxu0 0.0
  %668 = vmatpush1.msra.mxu0 %v652
  %669 = vmatprep.subr.mxu0 0.0
  %670 = vmatpush1.msra.mxu0 %v653
  %671 = vmatprep.subr.mxu0 0.0
  %672 = vmatpush1.msra.mxu0 %v654
  %673 = vmatprep.subr.mxu0 0.0
  %674 = vmatpush1.msra.mxu0 %v655
  %675 = vmatprep.subr.mxu0 0.0
  %676 = vmatpush1.msra.mxu0 %v656
  %677 = vmatprep.subr.mxu0 0.0
  %678 = vmatpush1.msra.mxu0 %v657
  %679 = vmatprep.subr.mxu0 0.0
  %680 = vmatpush1.msra.mxu0 %v658
  %681 = vmatprep.subr.mxu0 0.0
  %682 = vmatpush1.msra.mxu0 0.0
  %683 = vmatprep.subr.mxu0 0.0
  %684 = vmatpush1.msra.mxu0 0.0
  %685 = vmatprep.subr.mxu0 0.0
  %686 = vmatpush1.msra.mxu0 0.0
  %687 = vmatprep.subr.mxu0 0.0
  %688 = vmatpush1.msra.mxu0 0.0
  %689 = vmatprep.subr.mxu0 0.0
  %690 = vmatpush1.msra.mxu0 0.0
  %691 = vmatprep.subr.mxu0 0.0
  %692 = vmatpush1.msra.mxu0 0.0
  %693 = vmatprep.subr.mxu0 0.0
  %694 = vmatpush1.msra.mxu0 0.0
  %695 = vmatprep.subr.mxu0 0.0
  %696 = vmatpush1.msra.mxu0 0.0
  %697 = vmatprep.subr.mxu0 0.0
  %698 = vmatpush1.msra.mxu0 0.0
  %699 = vmatprep.subr.mxu0 0.0
  %700 = vmatpush1.msra.mxu0 0.0
  %701 = vmatprep.subr.mxu0 0.0
  %702 = vmatpush1.msra.mxu0 0.0
  %703 = vmatprep.subr.mxu0 0.0
  %704 = vmatpush1.msra.mxu0 0.0
  %705 = vmatprep.subr.mxu0 0.0
  %706 = vmatpush1.msra.mxu0 0.0
  %707 = vmatprep.subr.mxu0 0.0
  %708 = vmatpush1.msra.mxu0 0.0
  %709 = vmatprep.subr.mxu0 0.0
  %710 = vmatpush1.msra.mxu0 0.0
  %711 = vmatprep.subr.mxu0 0.0
  %712 = vmatpush1.msra.mxu0 0.0
  %713 = vmatprep.subr.mxu0 0.0
  %714 = vmatpush1.msra.mxu0 0.0
  %715 = vmatprep.subr.mxu0 0.0
  %716 = vmatpush1.msra.mxu0 0.0
  %717 = vmatprep.subr.mxu0 0.0
  %718 = vmatpush1.msra.mxu0 0.0
  %719 = vmatprep.subr.mxu0 0.0
  %720 = vmatpush1.msra.mxu0 0.0
  %721 = vmatprep.subr.mxu0 0.0
  %722 = vmatpush1.msra.mxu0 0.0
  %723 = vmatprep.subr.mxu0 0.0
  %724 = vmatpush1.msra.mxu0 0.0
  %725 = vmatprep.subr.mxu0 0.0
  %726 = vmatpush1.msra.mxu0 0.0
  %727 = vmatprep.subr.mxu0 0.0
  %728 = vmatpush1.msra.mxu0 0.0
  %729 = vmatprep.mubr.f32.mxu0 0.0
  %730 = vmatmul.mubr.f32.gmra.mrb[0].mxu0 %v660
  %v731 = vpop.f32.mrb[0].mxu0
  %v732 = vadd.f32 0.0, %v731
  %v733 = vpop.f32.mrb[0].mxu0
  %734 = vmatprep.mubr.f32.mxu0 0.0
  %735 = vmatmul.mubr.f32.gmra.mrb[0].mxu0 %v663
  %v736 = vpop.f32.mrb[0].mxu0
  %v737 = vadd.f32 0.0, %v736
  %v738 = vpop.f32.mrb[0].mxu0
  %739 = vdwg.mxu0
  %v740 = vadd.f32 %v136, %v732
  %v741 = vadd.f32 %v141, %v737
  %v742 = vmax.f32 %v740, 0.0
  %v743 = vmax.f32 %v741, 0.0
  %s744 = scalar_lea.vmem %s4, 288
  %v745 = vld [vmem:[%s744] sm:$0xff]
  %v746 = vld [vmem:[%s744 + $0x8] sm:$0xff]
  %v747 = vld [vmem:[%s744 + $0x10] sm:$0xff]
  %v748 = vld [vmem:[%s744 + $0x18] sm:$0xff]
  %v749 = vld [vmem:[%s744 + $0x20] sm:$0xff]
  %v750 = vld [vmem:[%s744 + $0x28] sm:$0xff]
  %v751 = vld [vmem:[%s744 + $0x30] sm:$0xff]
  %v752 = vld [vmem:[%s744 + $0x38] sm:$0xff]
  %v753 = vld [vmem:[%s744 + $0x40] sm:$0xff]
  %v754 = vld [vmem:[%s744 + $0x48] sm:$0xff]
  %v755 = vld [vmem:[%s744 + $0x50] sm:$0xff]
  %v756 = vld [vmem:[%s744 + $0x58] sm:$0xff]
  %s757 = scalar_lea.vmem %s5, 3
  %v758 = vld [vmem:[%s757] sm:$0x1]
  %v760 = vlaneseq
  %v761 = vshrl.u32 %v760, 7
  %v762 = vsub.s32 0, %v761
  %v763 = vrot.slane %v758, %v762
  %v766 = vsel %vm165, %v742, 0
  %v769 = vsel %vm165, %v743, 0
  %771 = vmatprep.subr.mxu0 0.0
  %772 = vmatpush1.msra.mxu0 %v745
  %773 = vmatprep.subr.mxu0 0.0
  %774 = vmatpush1.msra.mxu0 %v746
  %775 = vmatprep.subr.mxu0 0.0
  %776 = vmatpush1.msra.mxu0 %v747
  %777 = vmatprep.subr.mxu0 0.0
  %778 = vmatpush1.msra.mxu0 %v748
  %779 = vmatprep.subr.mxu0 0.0
  %780 = vmatpush1.msra.mxu0 %v749
  %781 = vmatprep.subr.mxu0 0.0
  %782 = vmatpush1.msra.mxu0 %v750
  %783 = vmatprep.subr.mxu0 0.0
  %784 = vmatpush1.msra.mxu0 %v751
  %785 = vmatprep.subr.mxu0 0.0
  %786 = vmatpush1.msra.mxu0 %v752
  %787 = vmatprep.subr.mxu0 0.0
  %788 = vmatpush1.msra.mxu0 %v753
  %789 = vmatprep.subr.mxu0 0.0
  %790 = vmatpush1.msra.mxu0 %v754
  %791 = vmatprep.subr.mxu0 0.0
  %792 = vmatpush1.msra.mxu0 %v755
  %793 = vmatprep.subr.mxu0 0.0
  %794 = vmatpush1.msra.mxu0 %v756
  %795 = vmatprep.subr.mxu0 0.0
  %796 = vmatpush1.msra.mxu0 0.0
  %797 = vmatprep.subr.mxu0 0.0
  %798 = vmatpush1.msra.mxu0 0.0
  %799 = vmatprep.subr.mxu0 0.0
  %800 = vmatpush1.msra.mxu0 0.0
  %801 = vmatprep.subr.mxu0 0.0
  %802 = vmatpush1.msra.mxu0 0.0
  %803 = vmatprep.subr.mxu0 0.0
  %804 = vmatpush1.msra.mxu0 0.0
  %805 = vmatprep.subr.mxu0 0.0
  %806 = vmatpush1.msra.mxu0 0.0
  %807 = vmatprep.subr.mxu0 0.0
  %808 = vmatpush1.msra.mxu0 0.0
  %809 = vmatprep.subr.mxu0 0.0
  %810 = vmatpush1.msra.mxu0 0.0
  %811 = vmatprep.subr.mxu0 0.0
  %812 = vmatpush1.msra.mxu0 0.0
  %813 = vmatprep.subr.mxu0 0.0
  %814 = vmatpush1.msra.mxu0 0.0
  %815 = vmatprep.subr.mxu0 0.0
  %816 = vmatpush1.msra.mxu0 0.0
  %817 = vmatprep.subr.mxu0 0.0
  %818 = vmatpush1.msra.mxu0 0.0
  %819 = vmatprep.subr.mxu0 0.0
  %820 = vmatpush1.msra.mxu0 0.0
  %821 = vmatprep.subr.mxu0 0.0
  %822 = vmatpush1.msra.mxu0 0.0
  %823 = vmatprep.subr.mxu0 0.0
  %824 = vmatpush1.msra.mxu0 0.0
  %825 = vmatprep.subr.mxu0 0.0
  %826 = vmatpush1.msra.mxu0 0.0
  %827 = vmatprep.subr.mxu0 0.0
  %828 = vmatpush1.msra.mxu0 0.0
  %829 = vmatprep.subr.mxu0 0.0
  %830 = vmatpush1.msra.mxu0 0.0
  %831 = vmatprep.subr.mxu0 0.0
  %832 = vmatpush1.msra.mxu0 0.0
  %833 = vmatprep.subr.mxu0 0.0
  %834 = vmatpush1.msra.mxu0 0.0
  %835 = vmatprep.mubr.f32.mxu0 0.0
  %836 = vmatmul.mubr.f32.gmra.mrb[0].mxu0 %v766
  %v837 = vpop.f32.mrb[0].mxu0
  %v838 = vadd.f32 %v763, %v837
  %v839 = vpop.f32.mrb[0].mxu0
  %840 = vmatprep.mubr.f32.mxu0 0.0
  %841 = vmatmul.mubr.f32.gmra.mrb[0].mxu0 %v769
  %v842 = vpop.f32.mrb[0].mxu0
  %v843 = vadd.f32 %v763, %v842
  %v844 = vpop.f32.mrb[0].mxu0
  %845 = vdwg.mxu0
  %v846 = vmax.f32 %v838, 0.0
  %v847 = vmax.f32 %v843, 0.0
  %v848 = vadd.f32 %v648, %v846
  %v849 = vadd.f32 %v649, %v847
  %v850 = vld [vmem:[%s6] sm:$0xff]
  %v851 = vld [vmem:[%s6 + $0x8] sm:$0xff]
  %v852 = vld [vmem:[%s6 + $0x10] sm:$0xff]
  %v853 = vld [vmem:[%s6 + $0x18] sm:$0xff]
  %v854 = vld [vmem:[%s6 + $0x20] sm:$0xff]
  %v855 = vld [vmem:[%s6 + $0x28] sm:$0xff]
  %v856 = vld [vmem:[%s6 + $0x30] sm:$0xff]
  %v857 = vld [vmem:[%s6 + $0x38] sm:$0xff]
  %v858 = vld [vmem:[%s7] sm:$0x1]
  %v860 = vlaneseq
  %v861 = vshrl.u32 %v860, 7
  %v862 = vsub.s32 0, %v861
  %v863 = vrot.slane %v858, %v862
  %v866 = vsel %vm258, %v848, 0
  %v869 = vsel %vm258, %v849, 0
  %871 = vmatprep.subr.mxu0 0.0
  %872 = vmatpush1.msra.mxu0 %v850
  %873 = vmatprep.subr.mxu0 0.0
  %874 = vmatpush1.msra.mxu0 %v851
  %875 = vmatprep.subr.mxu0 0.0
  %876 = vmatpush1.msra.mxu0 %v852
  %877 = vmatprep.subr.mxu0 0.0
  %878 = vmatpush1.msra.mxu0 %v853
  %879 = vmatprep.subr.mxu0 0.0
  %880 = vmatpush1.msra.mxu0 %v854
  %881 = vmatprep.subr.mxu0 0.0
  %882 = vmatpush1.msra.mxu0 %v855
  %883 = vmatprep.subr.mxu0 0.0
  %884 = vmatpush1.msra.mxu0 %v856
  %885 = vmatprep.subr.mxu0 0.0
  %886 = vmatpush1.msra.mxu0 %v857
  %887 = vmatprep.subr.mxu0 0.0
  %888 = vmatpush1.msra.mxu0 0.0
  %889 = vmatprep.subr.mxu0 0.0
  %890 = vmatpush1.msra.mxu0 0.0
  %891 = vmatprep.subr.mxu0 0.0
  %892 = vmatpush1.msra.mxu0 0.0
  %893 = vmatprep.subr.mxu0 0.0
  %894 = vmatpush1.msra.mxu0 0.0
  %895 = vmatprep.subr.mxu0 0.0
  %896 = vmatpush1.msra.mxu0 0.0
  %897 = vmatprep.subr.mxu0 0.0
  %898 = vmatpush1.msra.mxu0 0.0
  %899 = vmatprep.subr.mxu0 0.0
  %900 = vmatpush1.msra.mxu0 0.0
  %901 = vmatprep.subr.mxu0 0.0
  %902 = vmatpush1.msra.mxu0 0.0
  %903 = vmatprep.subr.mxu0 0.0
  %904 = vmatpush1.msra.mxu0 0.0
  %905 = vmatprep.subr.mxu0 0.0
  %906 = vmatpush1.msra.mxu0 0.0
  %907 = vmatprep.subr.mxu0 0.0
  %908 = vmatpush1.msra.mxu0 0.0
  %909 = vmatprep.subr.mxu0 0.0
  %910 = vmatpush1.msra.mxu0 0.0
  %911 = vmatprep.subr.mxu0 0.0
  %912 = vmatpush1.msra.mxu0 0.0
  %913 = vmatprep.subr.mxu0 0.0
  %914 = vmatpush1.msra.mxu0 0.0
  %915 = vmatprep.subr.mxu0 0.0
  %916 = vmatpush1.msra.mxu0 0.0
  %917 = vmatprep.subr.mxu0 0.0
  %918 = vmatpush1.msra.mxu0 0.0
  %919 = vmatprep.subr.mxu0 0.0
  %920 = vmatpush1.msra.mxu0 0.0
  %921 = vmatprep.subr.mxu0 0.0
  %922 = vmatpush1.msra.mxu0 0.0
  %923 = vmatprep.subr.mxu0 0.0
  %924 = vmatpush1.msra.mxu0 0.0
  %925 = vmatprep.subr.mxu0 0.0
  %926 = vmatpush1.msra.mxu0 0.0
  %927 = vmatprep.subr.mxu0 0.0
  %928 = vmatpush1.msra.mxu0 0.0
  %929 = vmatprep.subr.mxu0 0.0
  %930 = vmatpush1.msra.mxu0 0.0
  %931 = vmatprep.subr.mxu0 0.0
  %932 = vmatpush1.msra.mxu0 0.0
  %933 = vmatprep.subr.mxu0 0.0
  %934 = vmatpush1.msra.mxu0 0.0
  %935 = vmatprep.mubr.f32.mxu0 0.0
  %936 = vmatmul.mubr.f32.gmra.mrb[0].mxu0 %v866
  %v937 = vpop.f32.mrb[0].mxu0
  %v938 = vadd.f32 %v863, %v937
  %v939 = vpop.f32.mrb[0].mxu0
  %940 = vmatprep.mubr.f32.mxu0 0.0
  %941 = vmatmul.mubr.f32.gmra.mrb[0].mxu0 %v869
  %v942 = vpop.f32.mrb[0].mxu0
  %v943 = vadd.f32 %v863, %v942
  %v944 = vpop.f32.mrb[0].mxu0
  %945 = vdwg.mxu0
  %v946 = vmax.f32 %v938, 0.0
  %v947 = vmax.f32 %v943, 0.0
  %v948 = vld [vmem:[%s8] sm:$0xff]
  %v949 = vld [vmem:[%s8 + $0x8] sm:$0xff]
  %v950 = vld [vmem:[%s8 + $0x10] sm:$0xff]
  %v951 = vld [vmem:[%s8 + $0x18] sm:$0xff]
  %v952 = vld [vmem:[%s8 + $0x20] sm:$0xff]
  %v953 = vld [vmem:[%s8 + $0x28] sm:$0xff]
  %v954 = vld [vmem:[%s8 + $0x30] sm:$0xff]
  %v955 = vld [vmem:[%s8 + $0x38] sm:$0xff]
  %v956 = vld [vmem:[%s8 + $0x40] sm:$0xff]
  %v957 = vld [vmem:[%s8 + $0x48] sm:$0xff]
  %v958 = vld [vmem:[%s8 + $0x50] sm:$0xff]
  %v959 = vld [vmem:[%s8 + $0x58] sm:$0xff]
  %v960 = vld [vmem:[%s8 + $0x60] sm:$0xff]
  %v961 = vld [vmem:[%s8 + $0x68] sm:$0xff]
  %v962 = vld [vmem:[%s8 + $0x70] sm:$0xff]
  %v963 = vld [vmem:[%s8 + $0x78] sm:$0xff]
  %v964 = vld [vmem:[%s9] sm:$0x1]
  %v966 = vlaneseq
  %v967 = vshrl.u32 %v966, 7
  %v968 = vsub.s32 0, %v967
  %v969 = vrot.slane %v964, %v968
  %971 = vmatprep.subr.mxu0 0.0
  %972 = vmatpush1.msra.mxu0 %v948
  %973 = vmatprep.subr.mxu0 0.0
  %974 = vmatpush1.msra.mxu0 %v949
  %975 = vmatprep.subr.mxu0 0.0
  %976 = vmatpush1.msra.mxu0 %v950
  %977 = vmatprep.subr.mxu0 0.0
  %978 = vmatpush1.msra.mxu0 %v951
  %979 = vmatprep.subr.mxu0 0.0
  %980 = vmatpush1.msra.mxu0 %v952
  %981 = vmatprep.subr.mxu0 0.0
  %982 = vmatpush1.msra.mxu0 %v953
  %983 = vmatprep.subr.mxu0 0.0
  %984 = vmatpush1.msra.mxu0 %v954
  %985 = vmatprep.subr.mxu0 0.0
  %986 = vmatpush1.msra.mxu0 %v955
  %987 = vmatprep.subr.mxu0 0.0
  %988 = vmatpush1.msra.mxu0 %v956
  %989 = vmatprep.subr.mxu0 0.0
  %990 = vmatpush1.msra.mxu0 %v957
  %991 = vmatprep.subr.mxu0 0.0
  %992 = vmatpush1.msra.mxu0 %v958
  %993 = vmatprep.subr.mxu0 0.0
  %994 = vmatpush1.msra.mxu0 %v959
  %995 = vmatprep.subr.mxu0 0.0
  %996 = vmatpush1.msra.mxu0 %v960
  %997 = vmatprep.subr.mxu0 0.0
  %998 = vmatpush1.msra.mxu0 %v961
  %999 = vmatprep.subr.mxu0 0.0
  %1000 = vmatpush1.msra.mxu0 %v962
  %1001 = vmatprep.subr.mxu0 0.0
  %1002 = vmatpush1.msra.mxu0 %v963
  %1003 = vmatprep.subr.mxu0 0.0
  %1004 = vmatpush1.msra.mxu0 0.0
  %1005 = vmatprep.subr.mxu0 0.0
  %1006 = vmatpush1.msra.mxu0 0.0
  %1007 = vmatprep.subr.mxu0 0.0
  %1008 = vmatpush1.msra.mxu0 0.0
  %1009 = vmatprep.subr.mxu0 0.0
  %1010 = vmatpush1.msra.mxu0 0.0
  %1011 = vmatprep.subr.mxu0 0.0
  %1012 = vmatpush1.msra.mxu0 0.0
  %1013 = vmatprep.subr.mxu0 0.0
  %1014 = vmatpush1.msra.mxu0 0.0
  %1015 = vmatprep.subr.mxu0 0.0
  %1016 = vmatpush1.msra.mxu0 0.0
  %1017 = vmatprep.subr.mxu0 0.0
  %1018 = vmatpush1.msra.mxu0 0.0
  %1019 = vmatprep.subr.mxu0 0.0
  %1020 = vmatpush1.msra.mxu0 0.0
  %1021 = vmatprep.subr.mxu0 0.0
  %1022 = vmatpush1.msra.mxu0 0.0
  %1023 = vmatprep.subr.mxu0 0.0
  %1024 = vmatpush1.msra.mxu0 0.0
  %1025 = vmatprep.subr.mxu0 0.0
  %1026 = vmatpush1.msra.mxu0 0.0
  %1027 = vmatprep.subr.mxu0 0.0
  %1028 = vmatpush1.msra.mxu0 0.0
  %1029 = vmatprep.subr.mxu0 0.0
  %1030 = vmatpush1.msra.mxu0 0.0
  %1031 = vmatprep.subr.mxu0 0.0
  %1032 = vmatpush1.msra.mxu0 0.0
  %1033 = vmatprep.subr.mxu0 0.0
  %1034 = vmatpush1.msra.mxu0 0.0
  %1035 = vmatprep.mubr.f32.mxu0 0.0
  %1036 = vmatmul.mubr.f32.gmra.mrb[0].mxu0 %v946
  %v1037 = vpop.f32.mrb[0].mxu0
  %v1038 = vadd.f32 %v969, %v1037
  %v1039 = vpop.f32.mrb[0].mxu0
  %1040 = vmatprep.mubr.f32.mxu0 0.0
  %1041 = vmatmul.mubr.f32.gmra.mrb[0].mxu0 %v947
  %v1042 = vpop.f32.mrb[0].mxu0
  %v1043 = vadd.f32 %v969, %v1042
  %v1044 = vpop.f32.mrb[0].mxu0
  %1045 = vdwg.mxu0
  %v1046 = vmax.f32 %v1038, 0.0
  %v1047 = vmax.f32 %v1043, 0.0
  %v1048 = vld [vmem:[%s10] sm:$0xff]
  %v1049 = vld [vmem:[%s10 + $0x8] sm:$0xff]
  %v1050 = vld [vmem:[%s10 + $0x10] sm:$0xff]
  %v1051 = vld [vmem:[%s10 + $0x18] sm:$0xff]
  %v1052 = vld [vmem:[%s10 + $0x20] sm:$0xff]
  %v1053 = vld [vmem:[%s10 + $0x28] sm:$0xff]
  %v1054 = vld [vmem:[%s10 + $0x30] sm:$0xff]
  %v1055 = vld [vmem:[%s10 + $0x38] sm:$0xff]
  %v1056 = vld [vmem:[%s10 + $0x40] sm:$0xff]
  %v1057 = vld [vmem:[%s10 + $0x48] sm:$0xff]
  %v1058 = vld [vmem:[%s10 + $0x50] sm:$0xff]
  %v1059 = vld [vmem:[%s10 + $0x58] sm:$0xff]
  %v1060 = vld [vmem:[%s10 + $0x60] sm:$0xff]
  %v1061 = vld [vmem:[%s10 + $0x68] sm:$0xff]
  %v1062 = vld [vmem:[%s10 + $0x70] sm:$0xff]
  %v1063 = vld [vmem:[%s10 + $0x78] sm:$0xff]
  %v1064 = vld [vmem:[%s11] sm:$0x1]
  %v1066 = vlaneseq
  %v1067 = vshrl.u32 %v1066, 7
  %v1068 = vsub.s32 0, %v1067
  %v1069 = vrot.slane %v1064, %v1068
  %1071 = vmatprep.subr.mxu0 0.0
  %1072 = vmatpush1.msra.mxu0 %v1048
  %1073 = vmatprep.subr.mxu0 0.0
  %1074 = vmatpush1.msra.mxu0 %v1049
  %1075 = vmatprep.subr.mxu0 0.0
  %1076 = vmatpush1.msra.mxu0 %v1050
  %1077 = vmatprep.subr.mxu0 0.0
  %1078 = vmatpush1.msra.mxu0 %v1051
  %1079 = vmatprep.subr.mxu0 0.0
  %1080 = vmatpush1.msra.mxu0 %v1052
  %1081 = vmatprep.subr.mxu0 0.0
  %1082 = vmatpush1.msra.mxu0 %v1053
  %1083 = vmatprep.subr.mxu0 0.0
  %1084 = vmatpush1.msra.mxu0 %v1054
  %1085 = vmatprep.subr.mxu0 0.0
  %1086 = vmatpush1.msra.mxu0 %v1055
  %1087 = vmatprep.subr.mxu0 0.0
  %1088 = vmatpush1.msra.mxu0 %v1056
  %1089 = vmatprep.subr.mxu0 0.0
  %1090 = vmatpush1.msra.mxu0 %v1057
  %1091 = vmatprep.subr.mxu0 0.0
  %1092 = vmatpush1.msra.mxu0 %v1058
  %1093 = vmatprep.subr.mxu0 0.0
  %1094 = vmatpush1.msra.mxu0 %v1059
  %1095 = vmatprep.subr.mxu0 0.0
  %1096 = vmatpush1.msra.mxu0 %v1060
  %1097 = vmatprep.subr.mxu0 0.0
  %1098 = vmatpush1.msra.mxu0 %v1061
  %1099 = vmatprep.subr.mxu0 0.0
  %1100 = vmatpush1.msra.mxu0 %v1062
  %1101 = vmatprep.subr.mxu0 0.0
  %1102 = vmatpush1.msra.mxu0 %v1063
  %1103 = vmatprep.subr.mxu0 0.0
  %1104 = vmatpush1.msra.mxu0 0.0
  %1105 = vmatprep.subr.mxu0 0.0
  %1106 = vmatpush1.msra.mxu0 0.0
  %1107 = vmatprep.subr.mxu0 0.0
  %1108 = vmatpush1.msra.mxu0 0.0
  %1109 = vmatprep.subr.mxu0 0.0
  %1110 = vmatpush1.msra.mxu0 0.0
  %1111 = vmatprep.subr.mxu0 0.0
  %1112 = vmatpush1.msra.mxu0 0.0
  %1113 = vmatprep.subr.mxu0 0.0
  %1114 = vmatpush1.msra.mxu0 0.0
  %1115 = vmatprep.subr.mxu0 0.0
  %1116 = vmatpush1.msra.mxu0 0.0
  %1117 = vmatprep.subr.mxu0 0.0
  %1118 = vmatpush1.msra.mxu0 0.0
  %1119 = vmatprep.subr.mxu0 0.0
  %1120 = vmatpush1.msra.mxu0 0.0
  %1121 = vmatprep.subr.mxu0 0.0
  %1122 = vmatpush1.msra.mxu0 0.0
  %1123 = vmatprep.subr.mxu0 0.0
  %1124 = vmatpush1.msra.mxu0 0.0
  %1125 = vmatprep.subr.mxu0 0.0
  %1126 = vmatpush1.msra.mxu0 0.0
  %1127 = vmatprep.subr.mxu0 0.0
  %1128 = vmatpush1.msra.mxu0 0.0
  %1129 = vmatprep.subr.mxu0 0.0
  %1130 = vmatpush1.msra.mxu0 0.0
  %1131 = vmatprep.subr.mxu0 0.0
  %1132 = vmatpush1.msra.mxu0 0.0
  %1133 = vmatprep.subr.mxu0 0.0
  %1134 = vmatpush1.msra.mxu0 0.0
  %1135 = vmatprep.mubr.f32.mxu0 0.0
  %1136 = vmatmul.mubr.f32.gmra.mrb[0].mxu0 %v1046
  %v1137 = vpop.f32.mrb[0].mxu0
  %v1138 = vadd.f32 %v1069, %v1137
  %v1139 = vpop.f32.mrb[0].mxu0
  %1140 = vmatprep.mubr.f32.mxu0 0.0
  %1141 = vmatmul.mubr.f32.gmra.mrb[0].mxu0 %v1047
  %v1142 = vpop.f32.mrb[0].mxu0
  %v1143 = vadd.f32 %v1069, %v1142
  %v1144 = vpop.f32.mrb[0].mxu0
  %1145 = vdwg.mxu0
  %v1146 = vmax.f32 %v1138, 0.0
  %v1147 = vmax.f32 %v1143, 0.0
  %v1148 = vld [vmem:[%s12] sm:$0xff]
  %v1149 = vld [vmem:[%s12 + $0x8] sm:$0xff]
  %v1150 = vld [vmem:[%s12 + $0x10] sm:$0xff]
  %v1151 = vld [vmem:[%s12 + $0x18] sm:$0xff]
  %v1152 = vld [vmem:[%s12 + $0x20] sm:$0xff]
  %v1153 = vld [vmem:[%s12 + $0x28] sm:$0xff]
  %v1154 = vld [vmem:[%s12 + $0x30] sm:$0xff]
  %v1155 = vld [vmem:[%s12 + $0x38] sm:$0xff]
  %v1156 = vld [vmem:[%s12 + $0x40] sm:$0xff]
  %v1157 = vld [vmem:[%s12 + $0x48] sm:$0xff]
  %v1158 = vld [vmem:[%s12 + $0x50] sm:$0xff]
  %v1159 = vld [vmem:[%s12 + $0x58] sm:$0xff]
  %v1160 = vld [vmem:[%s12 + $0x60] sm:$0xff]
  %v1161 = vld [vmem:[%s12 + $0x68] sm:$0xff]
  %v1162 = vld [vmem:[%s12 + $0x70] sm:$0xff]
  %v1163 = vld [vmem:[%s12 + $0x78] sm:$0xff]
  %v1164 = vld [vmem:[#allocation2] sm:$0x1]
  %v1166 = vlaneseq
  %v1167 = vshrl.u32 %v1166, 7
  %v1168 = vsub.s32 0, %v1167
  %v1169 = vrot.slane %v1164, %v1168
  %1171 = vmatprep.subr.mxu0 0.0
  %1172 = vmatpush1.msra.mxu0 %v1148
  %1173 = vmatprep.subr.mxu0 0.0
  %1174 = vmatpush1.msra.mxu0 %v1149
  %1175 = vmatprep.subr.mxu0 0.0
  %1176 = vmatpush1.msra.mxu0 %v1150
  %1177 = vmatprep.subr.mxu0 0.0
  %1178 = vmatpush1.msra.mxu0 %v1151
  %1179 = vmatprep.subr.mxu0 0.0
  %1180 = vmatpush1.msra.mxu0 %v1152
  %1181 = vmatprep.subr.mxu0 0.0
  %1182 = vmatpush1.msra.mxu0 %v1153
  %1183 = vmatprep.subr.mxu0 0.0
  %1184 = vmatpush1.msra.mxu0 %v1154
  %1185 = vmatprep.subr.mxu0 0.0
  %1186 = vmatpush1.msra.mxu0 %v1155
  %1187 = vmatprep.subr.mxu0 0.0
  %1188 = vmatpush1.msra.mxu0 %v1156
  %1189 = vmatprep.subr.mxu0 0.0
  %1190 = vmatpush1.msra.mxu0 %v1157
  %1191 = vmatprep.subr.mxu0 0.0
  %1192 = vmatpush1.msra.mxu0 %v1158
  %1193 = vmatprep.subr.mxu0 0.0
  %1194 = vmatpush1.msra.mxu0 %v1159
  %1195 = vmatprep.subr.mxu0 0.0
  %1196 = vmatpush1.msra.mxu0 %v1160
  %1197 = vmatprep.subr.mxu0 0.0
  %1198 = vmatpush1.msra.mxu0 %v1161
  %1199 = vmatprep.subr.mxu0 0.0
  %1200 = vmatpush1.msra.mxu0 %v1162
  %1201 = vmatprep.subr.mxu0 0.0
  %1202 = vmatpush1.msra.mxu0 %v1163
  %1203 = vmatprep.subr.mxu0 0.0
  %1204 = vmatpush1.msra.mxu0 0.0
  %1205 = vmatprep.subr.mxu0 0.0
  %1206 = vmatpush1.msra.mxu0 0.0
  %1207 = vmatprep.subr.mxu0 0.0
  %1208 = vmatpush1.msra.mxu0 0.0
  %1209 = vmatprep.subr.mxu0 0.0
  %1210 = vmatpush1.msra.mxu0 0.0
  %1211 = vmatprep.subr.mxu0 0.0
  %1212 = vmatpush1.msra.mxu0 0.0
  %1213 = vmatprep.subr.mxu0 0.0
  %1214 = vmatpush1.msra.mxu0 0.0
  %1215 = vmatprep.subr.mxu0 0.0
  %1216 = vmatpush1.msra.mxu0 0.0
  %1217 = vmatprep.subr.mxu0 0.0
  %1218 = vmatpush1.msra.mxu0 0.0
  %1219 = vmatprep.subr.mxu0 0.0
  %1220 = vmatpush1.msra.mxu0 0.0
  %1221 = vmatprep.subr.mxu0 0.0
  %1222 = vmatpush1.msra.mxu0 0.0
  %1223 = vmatprep.subr.mxu0 0.0
  %1224 = vmatpush1.msra.mxu0 0.0
  %1225 = vmatprep.subr.mxu0 0.0
  %1226 = vmatpush1.msra.mxu0 0.0
  %1227 = vmatprep.subr.mxu0 0.0
  %1228 = vmatpush1.msra.mxu0 0.0
  %1229 = vmatprep.subr.mxu0 0.0
  %1230 = vmatpush1.msra.mxu0 0.0
  %1231 = vmatprep.subr.mxu0 0.0
  %1232 = vmatpush1.msra.mxu0 0.0
  %1233 = vmatprep.subr.mxu0 0.0
  %1234 = vmatpush1.msra.mxu0 0.0
  %1235 = vmatprep.mubr.f32.mxu0 0.0
  %1236 = vmatmul.mubr.f32.gmra.mrb[0].mxu0 %v1146
  %v1237 = vpop.f32.mrb[0].mxu0
  %v1238 = vadd.f32 %v1169, %v1237
  %v1239 = vpop.f32.mrb[0].mxu0
  %1240 = vmatprep.mubr.f32.mxu0 0.0
  %1241 = vmatmul.mubr.f32.gmra.mrb[0].mxu0 %v1147
  %v1242 = vpop.f32.mrb[0].mxu0
  %v1243 = vadd.f32 %v1169, %v1242
  %v1244 = vpop.f32.mrb[0].mxu0
  %1245 = vdwg.mxu0
  %vm1246 = vcmask 7168
  %1247 = vst.msk [vmem:[%s14] sm:$0xff] %vm1246, %v1238
  %1248 = vst.msk [vmem:[%s14 + $0x8] sm:$0xff] %vm1246, %v1243
  // Predicated region
  $region58: #{nrdf_forward.1} parent=0 // pred_check
    _
  $region59: #{nrdf_forward.1} parent=0 // pred_check_branch
    %1250 = sbr.rel (0) target = $region61
  $region60: #{nrdf_forward.1} parent=0 // pred_region
    _
  $region61: #{nrdf_forward.1} parent=0 // pred_fallthru
    _
  // Predicated region
  $region62: #{nrdf_forward.1} parent=0 // pred_check
    _
  $region63: #{nrdf_forward.1} parent=0 // pred_check_branch
    %1252 = sbr.rel (0) target = $region65
  $region64: #{nrdf_forward.1} parent=0 // pred_region
    _
  $region65: #{nrdf_forward.1} parent=0 // pred_fallthru
    _

</llo_original>
